<compile_context>
chip_gen: v7x
topology: tpu7x:2x2x1
jax: 0.10.0
libtpu: 0.0.40
codegen_flags: <defaults>
</compile_context>

<pallas_src>
import jax
import jax.numpy as jnp
import numpy as np
from jax.experimental import pallas as pl
from jax.experimental.pallas import tpu as pltpu

S_LANES = 128   # packed state width (one vreg row)
A_LANES = 256   # fused f/f_b/g_b activation width (two vregs)


def ssm_kernel(uc_ref, consts_ref, w1_ref, w2_ref, out_ref, state_s, y_s):
    """One (batch-block, time-chunk) grid step of the packed-lane recurrence."""
    Tc = uc_ref.shape[0]

    w1 = w1_ref[...]
    w2 = w2_ref[...]
    c2 = consts_ref[1]
    lo_s = consts_ref[2]
    hi_s = consts_ref[3]
    lo_y = consts_ref[4]
    hi_y = consts_ref[5]
    keep = consts_ref[6]
    sa = consts_ref[7]
    sb = consts_ref[8]

    @pl.when(pl.program_id(1) == 0)
    def _init():
        s0 = consts_ref[0]
        state_s[...] = s0
        # initial y (NOT clipped, matching the reference module)
        y_s[...] = jnp.dot(s0, w2, preferred_element_type=jnp.float32) + c2

    # carry the recurrent state in values (registers) across the unrolled chunk
    state = state_s[...]
    y = y_s[...]
    for i in range(Tc):
        # record PRE-update state + carried y: one dense full-tile store
        out_ref[i] = state + y
        # fused f / f_b / g_b matmul (u projection + biases are precomputed in uc)
        act = jnp.tanh(
            jnp.dot(state, w1, preferred_element_type=jnp.float32) + uc_ref[i])
        # masked multiply-add combine (no cross-lane movement)
        pre = state * keep + act[:, :S_LANES] * sa + act[:, S_LANES:] * sb
        # hard constraint projection (single packed clip)
        state = jnp.minimum(jnp.maximum(pre, lo_s), hi_s)
        # y = h(x_p') + h_b(x_f', x_b') on pre-clip state; off the carried chain
        y_new = jnp.dot(pre, w2, preferred_element_type=jnp.float32) + c2
        y = jnp.minimum(jnp.maximum(y_new, lo_y), hi_y)
    state_s[...] = state
    y_s[...] = y


def run_simulator(x_f_0, x_b_0, u, theta_f, theta_h, scaler, params,
                  min_cons_hard_x_b_step, max_cons_hard_x_b_step,
                  min_cons_hard_x_step, max_cons_hard_x_step,
                  min_cons_hard_y_step, max_cons_hard_y_step):
    f32 = jnp.float32
    B, T, n_u = u.shape
    F = x_f_0.shape[1]
    Bb = x_b_0.shape[1]
    n_y = params["wh_x"].shape[1]

    OFF_XF, OFF_XB, OFF_XP, OFF_Y = 0, F, F + Bb, 2 * F + Bb
    assert OFF_Y + n_y <= S_LANES and S_LANES + F <= A_LANES, \
        "packed-lane layout requires 2*n_x_f + n_x_b + n_y <= 128"
    # TODO(synk): support state widths beyond one 128-lane vreg (tile the lane axis).

    x_mean = jnp.asarray(scaler["x_mean"], f32).reshape(F)
    x_std = jnp.asarray(scaler["x_std"], f32).reshape(F)
    y_mean = jnp.asarray(scaler["y_mean"], f32).reshape(n_y)
    y_std = jnp.asarray(scaler["y_std"], f32).reshape(n_y)
    u_mean = jnp.asarray(scaler["u_mean"], f32).reshape(n_u)
    u_std = jnp.asarray(scaler["u_std"], f32).reshape(n_u)
    x_istd = 1.0 / x_std
    y_istd = 1.0 / y_std

    p = {k: jnp.asarray(v, f32) for k, v in params.items()}

    # ---- fused recurrent weights W1 (state rows -> act columns) ----
    # act columns: [0,F)=f  [F,F+Bb)=g_b  [F+Bb,2F+Bb)=f(dup)  [128,128+F)=f_b
    W1 = jnp.zeros((S_LANES, A_LANES), f32)
    W1 = W1.at[OFF_XB:OFF_XB + Bb, OFF_XB:OFF_XB + Bb].set(p["wgb_b"])
    W1 = W1.at[OFF_XB:OFF_XB + Bb, S_LANES:S_LANES + F].set(p["wfb_b"])
    W1 = W1.at[OFF_XP:OFF_XP + F, OFF_XF:OFF_XF + F].set(p["wf_x"])
    W1 = W1.at[OFF_XP:OFF_XP + F, OFF_XB:OFF_XB + Bb].set(p["wgb_x"])
    W1 = W1.at[OFF_XP:OFF_XP + F, OFF_XP:OFF_XP + F].set(p["wf_x"])
    W1 = W1.at[OFF_XP:OFF_XP + F, S_LANES:S_LANES + F].set(p["wfb_x"])

    # ---- hoisted u projection (u de-normalization + theta/bias terms folded in) ----
    W1u = jnp.zeros((n_u, A_LANES), f32)
    W1u = W1u.at[:, OFF_XF:OFF_XF + F].set(p["wf_u"])
    W1u = W1u.at[:, OFF_XB:OFF_XB + Bb].set(p["wgb_u"])
    W1u = W1u.at[:, OFF_XP:OFF_XP + F].set(p["wf_u"])
    W1u = W1u.at[:, S_LANES:S_LANES + F].set(p["wfb_u"])

    const_f = theta_f.astype(f32) @ p["wf_th"] + p["bf"]            # (B, F)
    C1 = jnp.zeros((B, A_LANES), f32)
    C1 = C1.at[:, OFF_XF:OFF_XF + F].set(const_f)
    C1 = C1.at[:, OFF_XB:OFF_XB + Bb].set(jnp.broadcast_to(p["bgb"], (B, Bb)))
    C1 = C1.at[:, OFF_XP:OFF_XP + F].set(const_f)
    C1 = C1.at[:, S_LANES:S_LANES + F].set(jnp.broadcast_to(p["bfb"], (B, F)))

    uc = jnp.einsum("btu,ua->bta", u.astype(f32), u_std[:, None] * W1u,
                    preferred_element_type=f32)
    uc = uc + (u_mean[None, :] @ W1u)[0] + C1[:, None, :]           # (B, T, 256)

    # ---- fused readout W2 / C2 (y normalization folded into weights + bounds) ----
    W2 = jnp.zeros((S_LANES, S_LANES), f32)
    W2 = W2.at[OFF_XF:OFF_XF + F, OFF_Y:OFF_Y + n_y].set(
        x_std[:, None] * p["whb_x"] * y_istd[None, :])
    W2 = W2.at[OFF_XB:OFF_XB + Bb, OFF_Y:OFF_Y + n_y].set(p["whb_b"] * y_istd[None, :])
    W2 = W2.at[OFF_XP:OFF_XP + F, OFF_Y:OFF_Y + n_y].set(p["wh_x"] * y_istd[None, :])

    const_h = theta_h.astype(f32) @ p["wh_th"] + p["bh"]            # (B, n_y)
    c2_val = (const_h + p["bhb"] + (x_mean[None, :] @ p["whb_x"])
              - y_mean[None, :]) * y_istd[None, :]
    C2 = jnp.zeros((B, S_LANES), f32).at[:, OFF_Y:OFF_Y + n_y].set(c2_val)

    # ---- packed initial state, clip bounds, combine scales ----
    x_p0 = x_f_0.astype(f32) * x_std + x_mean                       # denormalized x_p
    state0 = jnp.zeros((B, S_LANES), f32)
    state0 = state0.at[:, OFF_XF:OFF_XF + F].set(x_f_0.astype(f32))
    state0 = state0.at[:, OFF_XB:OFF_XB + Bb].set(x_b_0.astype(f32))
    state0 = state0.at[:, OFF_XP:OFF_XP + F].set(x_p0)

    BIG = jnp.float32(1e30)
    lo_s = jnp.full((B, S_LANES), -BIG, f32)
    hi_s = jnp.full((B, S_LANES), BIG, f32)
    lo_s = lo_s.at[:, OFF_XF:OFF_XF + F].set(min_cons_hard_x_step.astype(f32))
    hi_s = hi_s.at[:, OFF_XF:OFF_XF + F].set(max_cons_hard_x_step.astype(f32))
    lo_s = lo_s.at[:, OFF_XB:OFF_XB + Bb].set(min_cons_hard_x_b_step.astype(f32))
    hi_s = hi_s.at[:, OFF_XB:OFF_XB + Bb].set(max_cons_hard_x_b_step.astype(f32))
    lo_s = lo_s.at[:, OFF_XP:OFF_XP + F].set(min_cons_hard_x_step.astype(f32) * x_std + x_mean)
    hi_s = hi_s.at[:, OFF_XP:OFF_XP + F].set(max_cons_hard_x_step.astype(f32) * x_std + x_mean)
    lo_y = jnp.full((B, S_LANES), -BIG, f32).at[:, OFF_Y:OFF_Y + n_y].set(
        min_cons_hard_y_step.astype(f32))
    hi_y = jnp.full((B, S_LANES), BIG, f32).at[:, OFF_Y:OFF_Y + n_y].set(
        max_cons_hard_y_step.astype(f32))

    keep = (jnp.zeros((S_LANES,), f32)
            .at[OFF_XF:OFF_XF + F].set(1.0)
            .at[OFF_XP:OFF_XP + F].set(1.0))
    sa = (jnp.zeros((S_LANES,), f32)
          .at[OFF_XF:OFF_XF + F].set(x_istd)
          .at[OFF_XB:OFF_XB + Bb].set(1.0)
          .at[OFF_XP:OFF_XP + F].set(1.0))
    sb = jnp.zeros((S_LANES,), f32).at[OFF_XF:OFF_XF + F].set(x_istd)

    # ---- batch / time padding & tiling ----
    B_pad = ((B + 7) // 8) * 8
    kind = ""
    try:
        kind = jax.devices()[0].device_kind.lower()
    except Exception:
        pass
    two_tc = ("v7" in kind) or ("7x" in kind)   # batch grid split only pays on v7x
    B_CHUNK = B_pad // 2 if (two_tc and B_pad >= 16 and (B_pad // 2) % 8 == 0) else B_pad

    T_CHUNK = min(T, 64)
    while T_CHUNK > 8 and B_CHUNK * T_CHUNK * A_LANES * 4 > 8 * 1024 * 1024:
        T_CHUNK = max(8, T_CHUNK // 2)
    T_pad = ((T + T_CHUNK - 1) // T_CHUNK) * T_CHUNK

    def pad_b(a):
        return jnp.pad(a, ((0, B_pad - B), (0, 0)))

    consts = jnp.stack([
        pad_b(state0), pad_b(C2), pad_b(lo_s), pad_b(hi_s), pad_b(lo_y), pad_b(hi_y),
        jnp.broadcast_to(keep, (B_pad, S_LANES)),
        jnp.broadcast_to(sa, (B_pad, S_LANES)),
        jnp.broadcast_to(sb, (B_pad, S_LANES)),
    ], axis=0)                                                       # (9, B_pad, 128)

    uc_t = jnp.transpose(uc, (1, 0, 2))                              # time-major (T,B,256)
    uc_t = jnp.pad(uc_t, ((0, T_pad - T), (0, B_pad - B), (0, 0)))

    grid = (B_pad // B_CHUNK, T_pad // T_CHUNK)
    packed = pl.pallas_call(
        ssm_kernel,
        out_shape=jax.ShapeDtypeStruct((T_pad, B_pad, S_LANES), f32),
        grid_spec=pltpu.PrefetchScalarGridSpec(
            num_scalar_prefetch=0,
            grid=grid,
            in_specs=[
                pl.BlockSpec((T_CHUNK, B_CHUNK, A_LANES), lambda b, t: (t, b, 0)),  # u_contrib
                pl.BlockSpec((9, B_CHUNK, S_LANES), lambda b, t: (0, b, 0)),        # consts
                pl.BlockSpec((S_LANES, A_LANES), lambda b, t: (0, 0)),              # W1
                pl.BlockSpec((S_LANES, S_LANES), lambda b, t: (0, 0)),              # W2
            ],
            out_specs=pl.BlockSpec((T_CHUNK, B_CHUNK, S_LANES), lambda b, t: (t, b, 0)),
            scratch_shapes=[
                pltpu.VMEM((B_CHUNK, S_LANES), f32),   # packed state carry
                pltpu.VMEM((B_CHUNK, S_LANES), f32),   # packed y carry
            ],
        ),
        compiler_params=pltpu.CompilerParams(
            dimension_semantics=("parallel", "arbitrary"),
            vmem_limit_bytes=32 * 1024 * 1024,
        ),
    )(uc_t, consts, W1, W2)

    packed = jnp.transpose(packed, (1, 0, 2))[:B, :T]
    x_f_norm = packed[..., OFF_XF:OFF_XF + F]          # already normalized in-kernel
    x_b_out = packed[..., OFF_XB:OFF_XB + Bb]          # raw (matches reference)
    y_norm = packed[..., OFF_Y:OFF_Y + n_y]            # already normalized in-kernel
    x_p_norm = x_f_norm                                # module normalizes x_f for x_p_norm
    return x_f_norm, x_b_out, y_norm, x_p_norm


# ----------------------------- pure-JAX reference ------------------------------
def reference_simulator(x_f_0, x_b_0, u, theta_f, theta_h, scaler, params,
                        min_xb, max_xb, min_x, max_x, min_y, max_y):
    def f(x_p, u_s):
        return jnp.tanh(x_p @ params["wf_x"] + u_s @ params["wf_u"]
                        + theta_f @ params["wf_th"] + params["bf"])

    def f_b(x_p, x_b, u_s):
        return jnp.tanh(x_p @ params["wfb_x"] + x_b @ params["wfb_b"]
                        + u_s @ params["wfb_u"] + params["bfb"])

    def g_b(x_p, x_b, u_s):
        return jnp.tanh(x_p @ params["wgb_x"] + x_b @ params["wgb_b"]
                        + u_s @ params["wgb_u"] + params["bgb"])

    def h(x_p):
        return x_p @ params["wh_x"] + theta_h @ params["wh_th"] + params["bh"]

    def h_b(x_f, x_b):
        return x_f @ params["whb_x"] + x_b @ params["whb_b"] + params["bhb"]

    u_d = u * scaler["u_std"] + scaler["u_mean"]
    x_f_step = x_f_0 * scaler["x_std"] + scaler["x_mean"]
    x_p_step = x_f_step
    x_b_step = x_b_0
    min_x_d = min_x * scaler["x_std"] + scaler["x_mean"]
    max_x_d = max_x * scaler["x_std"] + scaler["x_mean"]
    min_y_d = min_y * scaler["y_std"] + scaler["y_mean"]
    max_y_d = max_y * scaler["y_std"] + scaler["y_mean"]
    y_step = h(x_p_step) + h_b(x_f_step, x_b_step)

    T = u.shape[1]
    xs_f, xs_b, ys = [], [], []
    for t in range(T):
        u_s = u_d[:, t, :]
        xs_f.append(x_f_step)
        xs_b.append(x_b_step)
        ys.append(y_step)
        dx_b = g_b(x_p_step, x_b_step, u_s)
        dx_p = f(x_p_step, u_s)
        dx_f = dx_p + f_b(x_p_step, x_b_step, u_s)
        x_f_step = x_f_step + dx_f
        x_p_step = x_p_step + dx_p
        x_b_step = dx_b
        y_step = h(x_p_step) + h_b(x_f_step, x_b_step)
        x_f_step = jnp.clip(x_f_step, min_x_d, max_x_d)
        x_p_step = jnp.clip(x_p_step, min_x_d, max_x_d)
        y_step = jnp.clip(y_step, min_y_d, max_y_d)
        x_b_step = jnp.clip(x_b_step, min_xb, max_xb)

    x_f = jnp.stack(xs_f, axis=1)
    x_b = jnp.stack(xs_b, axis=1)
    y = jnp.stack(ys, axis=1)
    x_f_norm = (x_f - scaler["x_mean"]) / scaler["x_std"]
    y_norm = (y - scaler["y_mean"]) / scaler["y_std"]
    return x_f_norm, x_b, y_norm, x_f_norm


if __name__ == "__main__":
    key = jax.random.PRNGKey(0)
    B, T = 4, 8
    n_x_f, n_x_b, n_u, n_y, n_th_f, n_th_h = 8, 8, 4, 4, 4, 4

    ks = iter(jax.random.split(key, 40))
    nrm = lambda shape, s=0.1: s * jax.random.normal(next(ks), shape, jnp.float32)

    params = dict(
        wf_x=nrm((n_x_f, n_x_f)), wf_u=nrm((n_u, n_x_f)),
        wf_th=nrm((n_th_f, n_x_f)), bf=nrm((1, n_x_f)),
        wfb_x=nrm((n_x_f, n_x_f)), wfb_b=nrm((n_x_b, n_x_f)),
        wfb_u=nrm((n_u, n_x_f)), bfb=nrm((1, n_x_f)),
        wgb_x=nrm((n_x_f, n_x_b)), wgb_b=nrm((n_x_b, n_x_b)),
        wgb_u=nrm((n_u, n_x_b)), bgb=nrm((1, n_x_b)),
        wh_x=nrm((n_x_f, n_y)), wh_th=nrm((n_th_h, n_y)), bh=nrm((1, n_y)),
        whb_x=nrm((n_x_f, n_y)), whb_b=nrm((n_x_b, n_y)), bhb=nrm((1, n_y)),
    )

    scaler = dict(
        u_mean=nrm((n_u,)), u_std=1.0 + 0.1 * jnp.abs(nrm((n_u,))),
        x_mean=nrm((n_x_f,)), x_std=1.0 + 0.1 * jnp.abs(nrm((n_x_f,))),
        y_mean=nrm((n_y,)), y_std=1.0 + 0.1 * jnp.abs(nrm((n_y,))),
    )

    x_f_0 = nrm((B, n_x_f), 1.0)
    x_b_0 = nrm((B, n_x_b), 1.0)
    u = nrm((B, T, n_u), 1.0)
    theta_f = nrm((B, n_th_f), 1.0)
    theta_h = nrm((B, n_th_h), 1.0)

    min_xb = -5.0 * jnp.ones((B, n_x_b), jnp.float32)
    max_xb = 5.0 * jnp.ones((B, n_x_b), jnp.float32)
    min_x = -5.0 * jnp.ones((B, n_x_f), jnp.float32)
    max_x = 5.0 * jnp.ones((B, n_x_f), jnp.float32)
    min_y = -5.0 * jnp.ones((B, n_y), jnp.float32)
    max_y = 5.0 * jnp.ones((B, n_y), jnp.float32)

    run = jax.jit(run_simulator)
    outs = run(x_f_0, x_b_0, u, theta_f, theta_h, scaler, params,
               min_xb, max_xb, min_x, max_x, min_y, max_y)
    outs = jax.block_until_ready(outs)
    x_f_norm, x_b_out, y_norm, x_p_norm = outs

    assert x_f_norm.shape == (B, T, n_x_f)
    assert x_b_out.shape == (B, T, n_x_b)
    assert y_norm.shape == (B, T, n_y)
    assert x_p_norm.shape == (B, T, n_x_f)

    # correctness vs pure-JAX reference of the module (loose tol: MXU default precision)
    ref = reference_simulator(x_f_0, x_b_0, u, theta_f, theta_h, scaler, params,
                              min_xb, max_xb, min_x, max_x, min_y, max_y)
    for got, want in zip(outs, ref):
        np.testing.assert_allclose(np.asarray(got), np.asarray(want), rtol=5e-2, atol=5e-2)

    print("KERNEL_OK")
</pallas_src>

<mosaic_0001>
module attributes {stable_mosaic.version = 11 : i64} {
  func.func @ssm_kernel(%arg0: i32, %arg1: i32, %arg2: memref<8x8x256xf32, #tpu.memory_space<vmem>>, %arg3: memref<9x8x128xf32, #tpu.memory_space<vmem>>, %arg4: memref<128x256xf32, #tpu.memory_space<vmem>>, %arg5: memref<128x128xf32, #tpu.memory_space<vmem>>, %arg6: memref<8x8x128xf32, #tpu.memory_space<vmem>>, %arg7: memref<8x128xf32, #tpu.memory_space<vmem>>, %arg8: memref<8x128xf32, #tpu.memory_space<vmem>>) attributes {dimension_semantics = [#tpu.dimension_semantics<parallel>, #tpu.dimension_semantics<arbitrary>], iteration_bounds = array<i64: 1, 1>, scalar_prefetch = 0 : i64, scratch_operands = 2 : i64, tpu.core_type = #tpu.core_type<tc>, window_params = [{transform_indices = @transform_0, window_bounds = array<i64: 8, 8, 256>}, {transform_indices = @transform_1, window_bounds = array<i64: 9, 8, 128>}, {pipeline_mode = #tpu.pipeline_mode<synchronous>, transform_indices = @transform_2, window_bounds = array<i64: 128, 256>}, {pipeline_mode = #tpu.pipeline_mode<synchronous>, transform_indices = @transform_3, window_bounds = array<i64: 128, 128>}, {transform_indices = @transform_4, window_bounds = array<i64: 8, 8, 128>}]} {
    %c0 = arith.constant 0 : index
    %c0_0 = arith.constant 0 : index
    %0 = vector.load %arg4[%c0, %c0_0] : memref<128x256xf32, #tpu.memory_space<vmem>>, vector<128x256xf32>
    %c0_1 = arith.constant 0 : index
    %c0_2 = arith.constant 0 : index
    %1 = vector.load %arg5[%c0_1, %c0_2] : memref<128x128xf32, #tpu.memory_space<vmem>>, vector<128x128xf32>
    %c1 = arith.constant 1 : index
    %c0_3 = arith.constant 0 : index
    %c0_4 = arith.constant 0 : index
    %2 = vector.load %arg3[%c1, %c0_3, %c0_4] : memref<9x8x128xf32, #tpu.memory_space<vmem>>, vector<1x8x128xf32>
    %3 = vector.shape_cast %2 : vector<1x8x128xf32> to vector<8x128xf32>
    %c2 = arith.constant 2 : index
    %c0_5 = arith.constant 0 : index
    %c0_6 = arith.constant 0 : index
    %4 = vector.load %arg3[%c2, %c0_5, %c0_6] : memref<9x8x128xf32, #tpu.memory_space<vmem>>, vector<1x8x128xf32>
    %5 = vector.shape_cast %4 : vector<1x8x128xf32> to vector<8x128xf32>
    %c3 = arith.constant 3 : index
    %c0_7 = arith.constant 0 : index
    %c0_8 = arith.constant 0 : index
    %6 = vector.load %arg3[%c3, %c0_7, %c0_8] : memref<9x8x128xf32, #tpu.memory_space<vmem>>, vector<1x8x128xf32>
    %7 = vector.shape_cast %6 : vector<1x8x128xf32> to vector<8x128xf32>
    %c4 = arith.constant 4 : index
    %c0_9 = arith.constant 0 : index
    %c0_10 = arith.constant 0 : index
    %8 = vector.load %arg3[%c4, %c0_9, %c0_10] : memref<9x8x128xf32, #tpu.memory_space<vmem>>, vector<1x8x128xf32>
    %9 = vector.shape_cast %8 : vector<1x8x128xf32> to vector<8x128xf32>
    %c5 = arith.constant 5 : index
    %c0_11 = arith.constant 0 : index
    %c0_12 = arith.constant 0 : index
    %10 = vector.load %arg3[%c5, %c0_11, %c0_12] : memref<9x8x128xf32, #tpu.memory_space<vmem>>, vector<1x8x128xf32>
    %11 = vector.shape_cast %10 : vector<1x8x128xf32> to vector<8x128xf32>
    %c6 = arith.constant 6 : index
    %c0_13 = arith.constant 0 : index
    %c0_14 = arith.constant 0 : index
    %12 = vector.load %arg3[%c6, %c0_13, %c0_14] : memref<9x8x128xf32, #tpu.memory_space<vmem>>, vector<1x8x128xf32>
    %13 = vector.shape_cast %12 : vector<1x8x128xf32> to vector<8x128xf32>
    %c7 = arith.constant 7 : index
    %c0_15 = arith.constant 0 : index
    %c0_16 = arith.constant 0 : index
    %14 = vector.load %arg3[%c7, %c0_15, %c0_16] : memref<9x8x128xf32, #tpu.memory_space<vmem>>, vector<1x8x128xf32>
    %15 = vector.shape_cast %14 : vector<1x8x128xf32> to vector<8x128xf32>
    %c8 = arith.constant 8 : index
    %c0_17 = arith.constant 0 : index
    %c0_18 = arith.constant 0 : index
    %16 = vector.load %arg3[%c8, %c0_17, %c0_18] : memref<9x8x128xf32, #tpu.memory_space<vmem>>, vector<1x8x128xf32>
    %17 = vector.shape_cast %16 : vector<1x8x128xf32> to vector<8x128xf32>
    %c0_i32 = arith.constant 0 : i32
    %18 = arith.cmpi eq, %arg1, %c0_i32 : i32
    %19 = arith.extui %18 : i1 to i32
    %c0_i32_19 = arith.constant 0 : i32
    %20 = arith.cmpi ne, %19, %c0_i32_19 : i32
    scf.if %20 {
      %c0_91 = arith.constant 0 : index
      %c0_92 = arith.constant 0 : index
      %c0_93 = arith.constant 0 : index
      %201 = vector.load %arg3[%c0_91, %c0_92, %c0_93] : memref<9x8x128xf32, #tpu.memory_space<vmem>>, vector<1x8x128xf32>
      %202 = vector.shape_cast %201 : vector<1x8x128xf32> to vector<8x128xf32>
      %c0_94 = arith.constant 0 : index
      %c0_95 = arith.constant 0 : index
      %203 = vector.load %arg7[%c0_94, %c0_95] : memref<8x128xf32, #tpu.memory_space<vmem>>, vector<8x128xf32>
      tpu.vector_store %arg7[%c0_94, %c0_95], %202 {strides = array<i32>} : memref<8x128xf32, #tpu.memory_space<vmem>>, vector<8x128xf32>,
      %cst_96 = arith.constant dense<0.000000e+00> : vector<8x128xf32>
      %204 = tpu.matmul %202, %1, %cst_96 {dimension_numbers = #tpu.dot_dimension_numbers<[1], [0], [0], [1], [0, 0, 1, 1], [], []>} : vector<8x128xf32>, vector<128x128xf32>, vector<8x128xf32> -> vector<8x128xf32>
      %205 = arith.addf %204, %3 : vector<8x128xf32>
      %c0_97 = arith.constant 0 : index
      %c0_98 = arith.constant 0 : index
      %206 = vector.load %arg8[%c0_97, %c0_98] : memref<8x128xf32, #tpu.memory_space<vmem>>, vector<8x128xf32>
      tpu.vector_store %arg8[%c0_97, %c0_98], %205 {strides = array<i32>} : memref<8x128xf32, #tpu.memory_space<vmem>>, vector<8x128xf32>,
    } else {
    }
    %c0_20 = arith.constant 0 : index
    %c0_21 = arith.constant 0 : index
    %21 = vector.load %arg7[%c0_20, %c0_21] : memref<8x128xf32, #tpu.memory_space<vmem>>, vector<8x128xf32>
    %c0_22 = arith.constant 0 : index
    %c0_23 = arith.constant 0 : index
    %22 = vector.load %arg8[%c0_22, %c0_23] : memref<8x128xf32, #tpu.memory_space<vmem>>, vector<8x128xf32>
    %23 = arith.addf %21, %22 : vector<8x128xf32>
    %c0_24 = arith.constant 0 : index
    %c0_25 = arith.constant 0 : index
    %c0_26 = arith.constant 0 : index
    %24 = vector.load %arg6[%c0_24, %c0_25, %c0_26] : memref<8x8x128xf32, #tpu.memory_space<vmem>>, vector<1x8x128xf32>
    %25 = vector.shape_cast %24 : vector<1x8x128xf32> to vector<8x128xf32>
    %26 = vector.shape_cast %23 : vector<8x128xf32> to vector<1x8x128xf32>
    tpu.vector_store %arg6[%c0_24, %c0_25, %c0_26], %26 {strides = array<i32>} : memref<8x8x128xf32, #tpu.memory_space<vmem>>, vector<1x8x128xf32>,
    %cst = arith.constant dense<0.000000e+00> : vector<8x256xf32>
    %27 = tpu.matmul %21, %0, %cst {dimension_numbers = #tpu.dot_dimension_numbers<[1], [0], [0], [1], [0, 0, 1, 1], [], []>} : vector<8x128xf32>, vector<128x256xf32>, vector<8x256xf32> -> vector<8x256xf32>
    %c0_27 = arith.constant 0 : index
    %c0_28 = arith.constant 0 : index
    %c0_29 = arith.constant 0 : index
    %28 = vector.load %arg2[%c0_27, %c0_28, %c0_29] : memref<8x8x256xf32, #tpu.memory_space<vmem>>, vector<1x8x256xf32>
    %29 = vector.shape_cast %28 : vector<1x8x256xf32> to vector<8x256xf32>
    %30 = arith.addf %27, %29 : vector<8x256xf32>
    %31 = math.tanh %30 : vector<8x256xf32>
    %32 = arith.mulf %21, %13 : vector<8x128xf32>
    %33 = vector.extract_strided_slice %31 {offsets = [0, 0], sizes = [8, 128], strides = [1, 1]} : vector<8x256xf32> to vector<8x128xf32>
    %34 = arith.mulf %33, %15 : vector<8x128xf32>
    %35 = arith.addf %32, %34 : vector<8x128xf32>
    %36 = vector.extract_strided_slice %31 {offsets = [0, 128], sizes = [8, 128], strides = [1, 1]} : vector<8x256xf32> to vector<8x128xf32>
    %37 = arith.mulf %36, %17 : vector<8x128xf32>
    %38 = arith.addf %35, %37 : vector<8x128xf32>
    %39 = arith.maximumf %38, %5 : vector<8x128xf32>
    %40 = arith.minimumf %39, %7 : vector<8x128xf32>
    %cst_30 = arith.constant dense<0.000000e+00> : vector<8x128xf32>
    %41 = tpu.matmul %38, %1, %cst_30 {dimension_numbers = #tpu.dot_dimension_numbers<[1], [0], [0], [1], [0, 0, 1, 1], [], []>} : vector<8x128xf32>, vector<128x128xf32>, vector<8x128xf32> -> vector<8x128xf32>
    %42 = arith.addf %41, %3 : vector<8x128xf32>
    %43 = arith.maximumf %42, %9 : vector<8x128xf32>
    %44 = arith.minimumf %43, %11 : vector<8x128xf32>
    %45 = arith.addf %40, %44 : vector<8x128xf32>
    %c1_31 = arith.constant 1 : index
    %c0_32 = arith.constant 0 : index
    %c0_33 = arith.constant 0 : index
    %46 = vector.load %arg6[%c1_31, %c0_32, %c0_33] : memref<8x8x128xf32, #tpu.memory_space<vmem>>, vector<1x8x128xf32>
    %47 = vector.shape_cast %46 : vector<1x8x128xf32> to vector<8x128xf32>
    %48 = vector.shape_cast %45 : vector<8x128xf32> to vector<1x8x128xf32>
    tpu.vector_store %arg6[%c1_31, %c0_32, %c0_33], %48 {strides = array<i32>} : memref<8x8x128xf32, #tpu.memory_space<vmem>>, vector<1x8x128xf32>,
    %cst_34 = arith.constant dense<0.000000e+00> : vector<8x256xf32>
    %49 = tpu.matmul %40, %0, %cst_34 {dimension_numbers = #tpu.dot_dimension_numbers<[1], [0], [0], [1], [0, 0, 1, 1], [], []>} : vector<8x128xf32>, vector<128x256xf32>, vector<8x256xf32> -> vector<8x256xf32>
    %c1_35 = arith.constant 1 : index
    %c0_36 = arith.constant 0 : index
    %c0_37 = arith.constant 0 : index
    %50 = vector.load %arg2[%c1_35, %c0_36, %c0_37] : memref<8x8x256xf32, #tpu.memory_space<vmem>>, vector<1x8x256xf32>
    %51 = vector.shape_cast %50 : vector<1x8x256xf32> to vector<8x256xf32>
    %52 = arith.addf %49, %51 : vector<8x256xf32>
    %53 = math.tanh %52 : vector<8x256xf32>
    %54 = arith.mulf %40, %13 : vector<8x128xf32>
    %55 = vector.extract_strided_slice %53 {offsets = [0, 0], sizes = [8, 128], strides = [1, 1]} : vector<8x256xf32> to vector<8x128xf32>
    %56 = arith.mulf %55, %15 : vector<8x128xf32>
    %57 = arith.addf %54, %56 : vector<8x128xf32>
    %58 = vector.extract_strided_slice %53 {offsets = [0, 128], sizes = [8, 128], strides = [1, 1]} : vector<8x256xf32> to vector<8x128xf32>
    %59 = arith.mulf %58, %17 : vector<8x128xf32>
    %60 = arith.addf %57, %59 : vector<8x128xf32>
    %61 = arith.maximumf %60, %5 : vector<8x128xf32>
    %62 = arith.minimumf %61, %7 : vector<8x128xf32>
    %cst_38 = arith.constant dense<0.000000e+00> : vector<8x128xf32>
    %63 = tpu.matmul %60, %1, %cst_38 {dimension_numbers = #tpu.dot_dimension_numbers<[1], [0], [0], [1], [0, 0, 1, 1], [], []>} : vector<8x128xf32>, vector<128x128xf32>, vector<8x128xf32> -> vector<8x128xf32>
    %64 = arith.addf %63, %3 : vector<8x128xf32>
    %65 = arith.maximumf %64, %9 : vector<8x128xf32>
    %66 = arith.minimumf %65, %11 : vector<8x128xf32>
    %67 = arith.addf %62, %66 : vector<8x128xf32>
    %c2_39 = arith.constant 2 : index
    %c0_40 = arith.constant 0 : index
    %c0_41 = arith.constant 0 : index
    %68 = vector.load %arg6[%c2_39, %c0_40, %c0_41] : memref<8x8x128xf32, #tpu.memory_space<vmem>>, vector<1x8x128xf32>
    %69 = vector.shape_cast %68 : vector<1x8x128xf32> to vector<8x128xf32>
    %70 = vector.shape_cast %67 : vector<8x128xf32> to vector<1x8x128xf32>
    tpu.vector_store %arg6[%c2_39, %c0_40, %c0_41], %70 {strides = array<i32>} : memref<8x8x128xf32, #tpu.memory_space<vmem>>, vector<1x8x128xf32>,
    %cst_42 = arith.constant dense<0.000000e+00> : vector<8x256xf32>
    %71 = tpu.matmul %62, %0, %cst_42 {dimension_numbers = #tpu.dot_dimension_numbers<[1], [0], [0], [1], [0, 0, 1, 1], [], []>} : vector<8x128xf32>, vector<128x256xf32>, vector<8x256xf32> -> vector<8x256xf32>
    %c2_43 = arith.constant 2 : index
    %c0_44 = arith.constant 0 : index
    %c0_45 = arith.constant 0 : index
    %72 = vector.load %arg2[%c2_43, %c0_44, %c0_45] : memref<8x8x256xf32, #tpu.memory_space<vmem>>, vector<1x8x256xf32>
    %73 = vector.shape_cast %72 : vector<1x8x256xf32> to vector<8x256xf32>
    %74 = arith.addf %71, %73 : vector<8x256xf32>
    %75 = math.tanh %74 : vector<8x256xf32>
    %76 = arith.mulf %62, %13 : vector<8x128xf32>
    %77 = vector.extract_strided_slice %75 {offsets = [0, 0], sizes = [8, 128], strides = [1, 1]} : vector<8x256xf32> to vector<8x128xf32>
    %78 = arith.mulf %77, %15 : vector<8x128xf32>
    %79 = arith.addf %76, %78 : vector<8x128xf32>
    %80 = vector.extract_strided_slice %75 {offsets = [0, 128], sizes = [8, 128], strides = [1, 1]} : vector<8x256xf32> to vector<8x128xf32>
    %81 = arith.mulf %80, %17 : vector<8x128xf32>
    %82 = arith.addf %79, %81 : vector<8x128xf32>
    %83 = arith.maximumf %82, %5 : vector<8x128xf32>
    %84 = arith.minimumf %83, %7 : vector<8x128xf32>
    %cst_46 = arith.constant dense<0.000000e+00> : vector<8x128xf32>
    %85 = tpu.matmul %82, %1, %cst_46 {dimension_numbers = #tpu.dot_dimension_numbers<[1], [0], [0], [1], [0, 0, 1, 1], [], []>} : vector<8x128xf32>, vector<128x128xf32>, vector<8x128xf32> -> vector<8x128xf32>
    %86 = arith.addf %85, %3 : vector<8x128xf32>
    %87 = arith.maximumf %86, %9 : vector<8x128xf32>
    %88 = arith.minimumf %87, %11 : vector<8x128xf32>
    %89 = arith.addf %84, %88 : vector<8x128xf32>
    %c3_47 = arith.constant 3 : index
    %c0_48 = arith.constant 0 : index
    %c0_49 = arith.constant 0 : index
    %90 = vector.load %arg6[%c3_47, %c0_48, %c0_49] : memref<8x8x128xf32, #tpu.memory_space<vmem>>, vector<1x8x128xf32>
    %91 = vector.shape_cast %90 : vector<1x8x128xf32> to vector<8x128xf32>
    %92 = vector.shape_cast %89 : vector<8x128xf32> to vector<1x8x128xf32>
    tpu.vector_store %arg6[%c3_47, %c0_48, %c0_49], %92 {strides = array<i32>} : memref<8x8x128xf32, #tpu.memory_space<vmem>>, vector<1x8x128xf32>,
    %cst_50 = arith.constant dense<0.000000e+00> : vector<8x256xf32>
    %93 = tpu.matmul %84, %0, %cst_50 {dimension_numbers = #tpu.dot_dimension_numbers<[1], [0], [0], [1], [0, 0, 1, 1], [], []>} : vector<8x128xf32>, vector<128x256xf32>, vector<8x256xf32> -> vector<8x256xf32>
    %c3_51 = arith.constant 3 : index
    %c0_52 = arith.constant 0 : index
    %c0_53 = arith.constant 0 : index
    %94 = vector.load %arg2[%c3_51, %c0_52, %c0_53] : memref<8x8x256xf32, #tpu.memory_space<vmem>>, vector<1x8x256xf32>
    %95 = vector.shape_cast %94 : vector<1x8x256xf32> to vector<8x256xf32>
    %96 = arith.addf %93, %95 : vector<8x256xf32>
    %97 = math.tanh %96 : vector<8x256xf32>
    %98 = arith.mulf %84, %13 : vector<8x128xf32>
    %99 = vector.extract_strided_slice %97 {offsets = [0, 0], sizes = [8, 128], strides = [1, 1]} : vector<8x256xf32> to vector<8x128xf32>
    %100 = arith.mulf %99, %15 : vector<8x128xf32>
    %101 = arith.addf %98, %100 : vector<8x128xf32>
    %102 = vector.extract_strided_slice %97 {offsets = [0, 128], sizes = [8, 128], strides = [1, 1]} : vector<8x256xf32> to vector<8x128xf32>
    %103 = arith.mulf %102, %17 : vector<8x128xf32>
    %104 = arith.addf %101, %103 : vector<8x128xf32>
    %105 = arith.maximumf %104, %5 : vector<8x128xf32>
    %106 = arith.minimumf %105, %7 : vector<8x128xf32>
    %cst_54 = arith.constant dense<0.000000e+00> : vector<8x128xf32>
    %107 = tpu.matmul %104, %1, %cst_54 {dimension_numbers = #tpu.dot_dimension_numbers<[1], [0], [0], [1], [0, 0, 1, 1], [], []>} : vector<8x128xf32>, vector<128x128xf32>, vector<8x128xf32> -> vector<8x128xf32>
    %108 = arith.addf %107, %3 : vector<8x128xf32>
    %109 = arith.maximumf %108, %9 : vector<8x128xf32>
    %110 = arith.minimumf %109, %11 : vector<8x128xf32>
    %111 = arith.addf %106, %110 : vector<8x128xf32>
    %c4_55 = arith.constant 4 : index
    %c0_56 = arith.constant 0 : index
    %c0_57 = arith.constant 0 : index
    %112 = vector.load %arg6[%c4_55, %c0_56, %c0_57] : memref<8x8x128xf32, #tpu.memory_space<vmem>>, vector<1x8x128xf32>
    %113 = vector.shape_cast %112 : vector<1x8x128xf32> to vector<8x128xf32>
    %114 = vector.shape_cast %111 : vector<8x128xf32> to vector<1x8x128xf32>
    tpu.vector_store %arg6[%c4_55, %c0_56, %c0_57], %114 {strides = array<i32>} : memref<8x8x128xf32, #tpu.memory_space<vmem>>, vector<1x8x128xf32>,
    %cst_58 = arith.constant dense<0.000000e+00> : vector<8x256xf32>
    %115 = tpu.matmul %106, %0, %cst_58 {dimension_numbers = #tpu.dot_dimension_numbers<[1], [0], [0], [1], [0, 0, 1, 1], [], []>} : vector<8x128xf32>, vector<128x256xf32>, vector<8x256xf32> -> vector<8x256xf32>
    %c4_59 = arith.constant 4 : index
    %c0_60 = arith.constant 0 : index
    %c0_61 = arith.constant 0 : index
    %116 = vector.load %arg2[%c4_59, %c0_60, %c0_61] : memref<8x8x256xf32, #tpu.memory_space<vmem>>, vector<1x8x256xf32>
    %117 = vector.shape_cast %116 : vector<1x8x256xf32> to vector<8x256xf32>
    %118 = arith.addf %115, %117 : vector<8x256xf32>
    %119 = math.tanh %118 : vector<8x256xf32>
    %120 = arith.mulf %106, %13 : vector<8x128xf32>
    %121 = vector.extract_strided_slice %119 {offsets = [0, 0], sizes = [8, 128], strides = [1, 1]} : vector<8x256xf32> to vector<8x128xf32>
    %122 = arith.mulf %121, %15 : vector<8x128xf32>
    %123 = arith.addf %120, %122 : vector<8x128xf32>
    %124 = vector.extract_strided_slice %119 {offsets = [0, 128], sizes = [8, 128], strides = [1, 1]} : vector<8x256xf32> to vector<8x128xf32>
    %125 = arith.mulf %124, %17 : vector<8x128xf32>
    %126 = arith.addf %123, %125 : vector<8x128xf32>
    %127 = arith.maximumf %126, %5 : vector<8x128xf32>
    %128 = arith.minimumf %127, %7 : vector<8x128xf32>
    %cst_62 = arith.constant dense<0.000000e+00> : vector<8x128xf32>
    %129 = tpu.matmul %126, %1, %cst_62 {dimension_numbers = #tpu.dot_dimension_numbers<[1], [0], [0], [1], [0, 0, 1, 1], [], []>} : vector<8x128xf32>, vector<128x128xf32>, vector<8x128xf32> -> vector<8x128xf32>
    %130 = arith.addf %129, %3 : vector<8x128xf32>
    %131 = arith.maximumf %130, %9 : vector<8x128xf32>
    %132 = arith.minimumf %131, %11 : vector<8x128xf32>
    %133 = arith.addf %128, %132 : vector<8x128xf32>
    %c5_63 = arith.constant 5 : index
    %c0_64 = arith.constant 0 : index
    %c0_65 = arith.constant 0 : index
    %134 = vector.load %arg6[%c5_63, %c0_64, %c0_65] : memref<8x8x128xf32, #tpu.memory_space<vmem>>, vector<1x8x128xf32>
    %135 = vector.shape_cast %134 : vector<1x8x128xf32> to vector<8x128xf32>
    %136 = vector.shape_cast %133 : vector<8x128xf32> to vector<1x8x128xf32>
    tpu.vector_store %arg6[%c5_63, %c0_64, %c0_65], %136 {strides = array<i32>} : memref<8x8x128xf32, #tpu.memory_space<vmem>>, vector<1x8x128xf32>,
    %cst_66 = arith.constant dense<0.000000e+00> : vector<8x256xf32>
    %137 = tpu.matmul %128, %0, %cst_66 {dimension_numbers = #tpu.dot_dimension_numbers<[1], [0], [0], [1], [0, 0, 1, 1], [], []>} : vector<8x128xf32>, vector<128x256xf32>, vector<8x256xf32> -> vector<8x256xf32>
    %c5_67 = arith.constant 5 : index
    %c0_68 = arith.constant 0 : index
    %c0_69 = arith.constant 0 : index
    %138 = vector.load %arg2[%c5_67, %c0_68, %c0_69] : memref<8x8x256xf32, #tpu.memory_space<vmem>>, vector<1x8x256xf32>
    %139 = vector.shape_cast %138 : vector<1x8x256xf32> to vector<8x256xf32>
    %140 = arith.addf %137, %139 : vector<8x256xf32>
    %141 = math.tanh %140 : vector<8x256xf32>
    %142 = arith.mulf %128, %13 : vector<8x128xf32>
    %143 = vector.extract_strided_slice %141 {offsets = [0, 0], sizes = [8, 128], strides = [1, 1]} : vector<8x256xf32> to vector<8x128xf32>
    %144 = arith.mulf %143, %15 : vector<8x128xf32>
    %145 = arith.addf %142, %144 : vector<8x128xf32>
    %146 = vector.extract_strided_slice %141 {offsets = [0, 128], sizes = [8, 128], strides = [1, 1]} : vector<8x256xf32> to vector<8x128xf32>
    %147 = arith.mulf %146, %17 : vector<8x128xf32>
    %148 = arith.addf %145, %147 : vector<8x128xf32>
    %149 = arith.maximumf %148, %5 : vector<8x128xf32>
    %150 = arith.minimumf %149, %7 : vector<8x128xf32>
    %cst_70 = arith.constant dense<0.000000e+00> : vector<8x128xf32>
    %151 = tpu.matmul %148, %1, %cst_70 {dimension_numbers = #tpu.dot_dimension_numbers<[1], [0], [0], [1], [0, 0, 1, 1], [], []>} : vector<8x128xf32>, vector<128x128xf32>, vector<8x128xf32> -> vector<8x128xf32>
    %152 = arith.addf %151, %3 : vector<8x128xf32>
    %153 = arith.maximumf %152, %9 : vector<8x128xf32>
    %154 = arith.minimumf %153, %11 : vector<8x128xf32>
    %155 = arith.addf %150, %154 : vector<8x128xf32>
    %c6_71 = arith.constant 6 : index
    %c0_72 = arith.constant 0 : index
    %c0_73 = arith.constant 0 : index
    %156 = vector.load %arg6[%c6_71, %c0_72, %c0_73] : memref<8x8x128xf32, #tpu.memory_space<vmem>>, vector<1x8x128xf32>
    %157 = vector.shape_cast %156 : vector<1x8x128xf32> to vector<8x128xf32>
    %158 = vector.shape_cast %155 : vector<8x128xf32> to vector<1x8x128xf32>
    tpu.vector_store %arg6[%c6_71, %c0_72, %c0_73], %158 {strides = array<i32>} : memref<8x8x128xf32, #tpu.memory_space<vmem>>, vector<1x8x128xf32>,
    %cst_74 = arith.constant dense<0.000000e+00> : vector<8x256xf32>
    %159 = tpu.matmul %150, %0, %cst_74 {dimension_numbers = #tpu.dot_dimension_numbers<[1], [0], [0], [1], [0, 0, 1, 1], [], []>} : vector<8x128xf32>, vector<128x256xf32>, vector<8x256xf32> -> vector<8x256xf32>
    %c6_75 = arith.constant 6 : index
    %c0_76 = arith.constant 0 : index
    %c0_77 = arith.constant 0 : index
    %160 = vector.load %arg2[%c6_75, %c0_76, %c0_77] : memref<8x8x256xf32, #tpu.memory_space<vmem>>, vector<1x8x256xf32>
    %161 = vector.shape_cast %160 : vector<1x8x256xf32> to vector<8x256xf32>
    %162 = arith.addf %159, %161 : vector<8x256xf32>
    %163 = math.tanh %162 : vector<8x256xf32>
    %164 = arith.mulf %150, %13 : vector<8x128xf32>
    %165 = vector.extract_strided_slice %163 {offsets = [0, 0], sizes = [8, 128], strides = [1, 1]} : vector<8x256xf32> to vector<8x128xf32>
    %166 = arith.mulf %165, %15 : vector<8x128xf32>
    %167 = arith.addf %164, %166 : vector<8x128xf32>
    %168 = vector.extract_strided_slice %163 {offsets = [0, 128], sizes = [8, 128], strides = [1, 1]} : vector<8x256xf32> to vector<8x128xf32>
    %169 = arith.mulf %168, %17 : vector<8x128xf32>
    %170 = arith.addf %167, %169 : vector<8x128xf32>
    %171 = arith.maximumf %170, %5 : vector<8x128xf32>
    %172 = arith.minimumf %171, %7 : vector<8x128xf32>
    %cst_78 = arith.constant dense<0.000000e+00> : vector<8x128xf32>
    %173 = tpu.matmul %170, %1, %cst_78 {dimension_numbers = #tpu.dot_dimension_numbers<[1], [0], [0], [1], [0, 0, 1, 1], [], []>} : vector<8x128xf32>, vector<128x128xf32>, vector<8x128xf32> -> vector<8x128xf32>
    %174 = arith.addf %173, %3 : vector<8x128xf32>
    %175 = arith.maximumf %174, %9 : vector<8x128xf32>
    %176 = arith.minimumf %175, %11 : vector<8x128xf32>
    %177 = arith.addf %172, %176 : vector<8x128xf32>
    %c7_79 = arith.constant 7 : index
    %c0_80 = arith.constant 0 : index
    %c0_81 = arith.constant 0 : index
    %178 = vector.load %arg6[%c7_79, %c0_80, %c0_81] : memref<8x8x128xf32, #tpu.memory_space<vmem>>, vector<1x8x128xf32>
    %179 = vector.shape_cast %178 : vector<1x8x128xf32> to vector<8x128xf32>
    %180 = vector.shape_cast %177 : vector<8x128xf32> to vector<1x8x128xf32>
    tpu.vector_store %arg6[%c7_79, %c0_80, %c0_81], %180 {strides = array<i32>} : memref<8x8x128xf32, #tpu.memory_space<vmem>>, vector<1x8x128xf32>,
    %cst_82 = arith.constant dense<0.000000e+00> : vector<8x256xf32>
    %181 = tpu.matmul %172, %0, %cst_82 {dimension_numbers = #tpu.dot_dimension_numbers<[1], [0], [0], [1], [0, 0, 1, 1], [], []>} : vector<8x128xf32>, vector<128x256xf32>, vector<8x256xf32> -> vector<8x256xf32>
    %c7_83 = arith.constant 7 : index
    %c0_84 = arith.constant 0 : index
    %c0_85 = arith.constant 0 : index
    %182 = vector.load %arg2[%c7_83, %c0_84, %c0_85] : memref<8x8x256xf32, #tpu.memory_space<vmem>>, vector<1x8x256xf32>
    %183 = vector.shape_cast %182 : vector<1x8x256xf32> to vector<8x256xf32>
    %184 = arith.addf %181, %183 : vector<8x256xf32>
    %185 = math.tanh %184 : vector<8x256xf32>
    %186 = arith.mulf %172, %13 : vector<8x128xf32>
    %187 = vector.extract_strided_slice %185 {offsets = [0, 0], sizes = [8, 128], strides = [1, 1]} : vector<8x256xf32> to vector<8x128xf32>
    %188 = arith.mulf %187, %15 : vector<8x128xf32>
    %189 = arith.addf %186, %188 : vector<8x128xf32>
    %190 = vector.extract_strided_slice %185 {offsets = [0, 128], sizes = [8, 128], strides = [1, 1]} : vector<8x256xf32> to vector<8x128xf32>
    %191 = arith.mulf %190, %17 : vector<8x128xf32>
    %192 = arith.addf %189, %191 : vector<8x128xf32>
    %193 = arith.maximumf %192, %5 : vector<8x128xf32>
    %194 = arith.minimumf %193, %7 : vector<8x128xf32>
    %cst_86 = arith.constant dense<0.000000e+00> : vector<8x128xf32>
    %195 = tpu.matmul %192, %1, %cst_86 {dimension_numbers = #tpu.dot_dimension_numbers<[1], [0], [0], [1], [0, 0, 1, 1], [], []>} : vector<8x128xf32>, vector<128x128xf32>, vector<8x128xf32> -> vector<8x128xf32>
    %196 = arith.addf %195, %3 : vector<8x128xf32>
    %197 = arith.maximumf %196, %9 : vector<8x128xf32>
    %198 = arith.minimumf %197, %11 : vector<8x128xf32>
    %c0_87 = arith.constant 0 : index
    %c0_88 = arith.constant 0 : index
    %199 = vector.load %arg7[%c0_87, %c0_88] : memref<8x128xf32, #tpu.memory_space<vmem>>, vector<8x128xf32>
    tpu.vector_store %arg7[%c0_87, %c0_88], %194 {strides = array<i32>} : memref<8x128xf32, #tpu.memory_space<vmem>>, vector<8x128xf32>,
    %c0_89 = arith.constant 0 : index
    %c0_90 = arith.constant 0 : index
    %200 = vector.load %arg8[%c0_89, %c0_90] : memref<8x128xf32, #tpu.memory_space<vmem>>, vector<8x128xf32>
    tpu.vector_store %arg8[%c0_89, %c0_90], %198 {strides = array<i32>} : memref<8x128xf32, #tpu.memory_space<vmem>>, vector<8x128xf32>,
    return
  }
  func.func @transform_0(%arg0: i32, %arg1: i32) -> (i32, i32, i32) {
    %c0_i32 = arith.constant 0 : i32
    %c0_i32_0 = arith.constant 0 : i32
    return %arg1, %arg0, %c0_i32 : i32, i32, i32
  }
  func.func @transform_1(%arg0: i32, %arg1: i32) -> (i32, i32, i32) {
    %c0_i32 = arith.constant 0 : i32
    %c0_i32_0 = arith.constant 0 : i32
    %c0_i32_1 = arith.constant 0 : i32
    return %c0_i32, %arg0, %c0_i32_0 : i32, i32, i32
  }
  func.func @transform_2(%arg0: i32, %arg1: i32) -> (i32, i32) {
    %c0_i32 = arith.constant 0 : i32
    %c0_i32_0 = arith.constant 0 : i32
    %c0_i32_1 = arith.constant 0 : i32
    return %c0_i32, %c0_i32_0 : i32, i32
  }
  func.func @transform_3(%arg0: i32, %arg1: i32) -> (i32, i32) {
    %c0_i32 = arith.constant 0 : i32
    %c0_i32_0 = arith.constant 0 : i32
    %c0_i32_1 = arith.constant 0 : i32
    return %c0_i32, %c0_i32_0 : i32, i32
  }
  func.func @transform_4(%arg0: i32, %arg1: i32) -> (i32, i32, i32) {
    %c0_i32 = arith.constant 0 : i32
    %c0_i32_0 = arith.constant 0 : i32
    return %arg1, %arg0, %c0_i32 : i32, i32, i32
  }
}

</mosaic_0001>

<llo_original>
// kernel: run_simulator.1
$region0: #{run_simulator.1}
  #allocation0 [shape = 'u32[]', space=smem, size = 0x4, offset = 0x4, fixed_abs, tag = 'smem constant byte address 0x4 - core index']
  #allocation1 [shape = 'u32[144,128]{1,0:T(1,128)}', space=vmem, size = 0x12000, scoped, tag = 'internal scratch']
  #allocation2 [shape = 'f32[8,128]{1,0:T(8,128)}', space=vmem, size = 0x1000, scoped, tag = 'scratch operand']
  #allocation3 [shape = 'f32[8,128]{1,0:T(8,128)}', space=vmem, size = 0x1000, scoped, tag = 'scratch operand']
  %s0 = inlined_call_operand.vmem [shape: f32[8,8,256], index: 0, kind: input, shape index: {}]
  %s1 = inlined_call_operand.vmem [shape: f32[9,8,128], index: 1, kind: input, shape index: {}]
  %s2 = inlined_call_operand.vmem [shape: f32[128,256], index: 2, kind: input, shape index: {}]
  %s3 = inlined_call_operand.vmem [shape: f32[128,128], index: 3, kind: input, shape index: {}]
  %s4 = inlined_call_operand.vmem [shape: f32[8,8,128], index: 4, kind: output, shape index: {}]
  %s5 = sld [smem:[#allocation0]]
  $region30: #{run_simulator.1} parent=0
    _
  %s7 = ssub.s32 1, %s5
  %s8 = scalar_select 0, %s7, %s5
  // Predicated region
  $region2: #{run_simulator.1} parent=0 // pred_check
    _
  $region3: #{run_simulator.1} parent=0 // pred_check_branch
    %10 = sbr.rel (0) target = $region5
  $region4: #{run_simulator.1} parent=0 // pred_region
    _
  $region5: #{run_simulator.1} parent=0 // pred_fallthru
    _
  // Predicated region
  $region6: #{run_simulator.1} parent=0 // pred_check
    _
  $region7: #{run_simulator.1} parent=0 // pred_check_branch
    %12 = sbr.rel (0) target = $region9
  $region8: #{run_simulator.1} parent=0 // pred_region
    _
  $region9: #{run_simulator.1} parent=0 // pred_fallthru
    _
  // Predicated region
  $region10: #{run_simulator.1} parent=0 // pred_check
    _
  $region11: #{run_simulator.1} parent=0 // pred_check_branch
    %14 = sbr.rel (0) target = $region13
  $region12: #{run_simulator.1} parent=0 // pred_region
    _
  $region13: #{run_simulator.1} parent=0 // pred_fallthru
    _
  // Predicated region
  $region14: #{run_simulator.1} parent=0 // pred_check
    _
  $region15: #{run_simulator.1} parent=0 // pred_check_branch
    %16 = sbr.rel (0) target = $region17
  $region16: #{run_simulator.1} parent=0 // pred_region
    _
  $region17: #{run_simulator.1} parent=0 // pred_fallthru
    _
  %v17 = vld [vmem:[%s2] sm:$0xff]
  %v18 = vld [vmem:[%s2 + $0x8] sm:$0xff]
  %v19 = vld [vmem:[%s2 + $0x10] sm:$0xff]
  %v20 = vld [vmem:[%s2 + $0x18] sm:$0xff]
  %v21 = vld [vmem:[%s2 + $0x20] sm:$0xff]
  %v22 = vld [vmem:[%s2 + $0x28] sm:$0xff]
  %v23 = vld [vmem:[%s2 + $0x30] sm:$0xff]
  %v24 = vld [vmem:[%s2 + $0x38] sm:$0xff]
  %v25 = vld [vmem:[%s2 + $0x40] sm:$0xff]
  %v26 = vld [vmem:[%s2 + $0x48] sm:$0xff]
  %v27 = vld [vmem:[%s2 + $0x50] sm:$0xff]
  %v28 = vld [vmem:[%s2 + $0x58] sm:$0xff]
  %v29 = vld [vmem:[%s2 + $0x60] sm:$0xff]
  %v30 = vld [vmem:[%s2 + $0x68] sm:$0xff]
  %v31 = vld [vmem:[%s2 + $0x70] sm:$0xff]
  %v32 = vld [vmem:[%s2 + $0x78] sm:$0xff]
  %v33 = vld [vmem:[%s2 + $0x80] sm:$0xff]
  %v34 = vld [vmem:[%s2 + $0x88] sm:$0xff]
  %v35 = vld [vmem:[%s2 + $0x90] sm:$0xff]
  %v36 = vld [vmem:[%s2 + $0x98] sm:$0xff]
  %v37 = vld [vmem:[%s2 + $0xa0] sm:$0xff]
  %v38 = vld [vmem:[%s2 + $0xa8] sm:$0xff]
  %v39 = vld [vmem:[%s2 + $0xb0] sm:$0xff]
  %v40 = vld [vmem:[%s2 + $0xb8] sm:$0xff]
  %v41 = vld [vmem:[%s2 + $0xc0] sm:$0xff]
  %v42 = vld [vmem:[%s2 + $0xc8] sm:$0xff]
  %v43 = vld [vmem:[%s2 + $0xd0] sm:$0xff]
  %v44 = vld [vmem:[%s2 + $0xd8] sm:$0xff]
  %v45 = vld [vmem:[%s2 + $0xe0] sm:$0xff]
  %v46 = vld [vmem:[%s2 + $0xe8] sm:$0xff]
  %v47 = vld [vmem:[%s2 + $0xf0] sm:$0xff]
  %v48 = vld [vmem:[%s2 + $0xf8] sm:$0xff]
  %v49 = vld [vmem:[%s3] sm:$0xff]
  %v50 = vld [vmem:[%s3 + $0x8] sm:$0xff]
  %v51 = vld [vmem:[%s3 + $0x10] sm:$0xff]
  %v52 = vld [vmem:[%s3 + $0x18] sm:$0xff]
  %v53 = vld [vmem:[%s3 + $0x20] sm:$0xff]
  %v54 = vld [vmem:[%s3 + $0x28] sm:$0xff]
  %v55 = vld [vmem:[%s3 + $0x30] sm:$0xff]
  %v56 = vld [vmem:[%s3 + $0x38] sm:$0xff]
  %v57 = vld [vmem:[%s3 + $0x40] sm:$0xff]
  %v58 = vld [vmem:[%s3 + $0x48] sm:$0xff]
  %v59 = vld [vmem:[%s3 + $0x50] sm:$0xff]
  %v60 = vld [vmem:[%s3 + $0x58] sm:$0xff]
  %v61 = vld [vmem:[%s3 + $0x60] sm:$0xff]
  %v62 = vld [vmem:[%s3 + $0x68] sm:$0xff]
  %v63 = vld [vmem:[%s3 + $0x70] sm:$0xff]
  %v64 = vld [vmem:[%s3 + $0x78] sm:$0xff]
  %s65 = scalar_lea.vmem %s1, 8
  %v66 = vld [vmem:[%s65] sm:$0xff]
  %s67 = scalar_lea.vmem %s1, 16
  %v68 = vld [vmem:[%s67] sm:$0xff]
  %s69 = scalar_lea.vmem %s1, 24
  %v70 = vld [vmem:[%s69] sm:$0xff]
  %s71 = scalar_lea.vmem %s1, 32
  %v72 = vld [vmem:[%s71] sm:$0xff]
  %s73 = scalar_lea.vmem %s1, 40
  %v74 = vld [vmem:[%s73] sm:$0xff]
  %s75 = scalar_lea.vmem %s1, 48
  %v76 = vld [vmem:[%s75] sm:$0xff]
  %s77 = scalar_lea.vmem %s1, 56
  %v78 = vld [vmem:[%s77] sm:$0xff]
  %s79 = scalar_lea.vmem %s1, 64
  %v80 = vld [vmem:[%s79] sm:$0xff]
  %p81 = scmp.eq.s32.totalorder 0, 0
  // Predicated region
  $region18: #{run_simulator.1} parent=0 // pred_check
    %p82 = pneg %p81
  $region19: #{run_simulator.1} parent=0 // pred_check_branch
    %84 = sbr.rel (%p82) target = $region21
  $region20: #{run_simulator.1} parent=0 // pred_region
    %v85 = vld [vmem:[%s1] sm:$0xff]
    %86 = vst [vmem:[#allocation2] sm:$0xff] %v85
    %87 = vmatprep.subr.mxu0 0.0
    %88 = vmatpush1.msra.mxu0 %v49
    %89 = vmatprep.subr.mxu0 0.0
    %90 = vmatpush1.msra.mxu0 %v50
    %91 = vmatprep.subr.mxu0 0.0
    %92 = vmatpush1.msra.mxu0 %v51
    %93 = vmatprep.subr.mxu0 0.0
    %94 = vmatpush1.msra.mxu0 %v52
    %95 = vmatprep.subr.mxu0 0.0
    %96 = vmatpush1.msra.mxu0 %v53
    %97 = vmatprep.subr.mxu0 0.0
    %98 = vmatpush1.msra.mxu0 %v54
    %99 = vmatprep.subr.mxu0 0.0
    %100 = vmatpush1.msra.mxu0 %v55
    %101 = vmatprep.subr.mxu0 0.0
    %102 = vmatpush1.msra.mxu0 %v56
    %103 = vmatprep.subr.mxu0 0.0
    %104 = vmatpush1.msra.mxu0 %v57
    %105 = vmatprep.subr.mxu0 0.0
    %106 = vmatpush1.msra.mxu0 %v58
    %107 = vmatprep.subr.mxu0 0.0
    %108 = vmatpush1.msra.mxu0 %v59
    %109 = vmatprep.subr.mxu0 0.0
    %110 = vmatpush1.msra.mxu0 %v60
    %111 = vmatprep.subr.mxu0 0.0
    %112 = vmatpush1.msra.mxu0 %v61
    %113 = vmatprep.subr.mxu0 0.0
    %114 = vmatpush1.msra.mxu0 %v62
    %115 = vmatprep.subr.mxu0 0.0
    %116 = vmatpush1.msra.mxu0 %v63
    %117 = vmatprep.subr.mxu0 0.0
    %118 = vmatpush1.msra.mxu0 %v64
    %119 = vmatprep.subr.mxu0 0.0
    %120 = vmatpush1.msra.mxu0 0.0
    %121 = vmatprep.subr.mxu0 0.0
    %122 = vmatpush1.msra.mxu0 0.0
    %123 = vmatprep.subr.mxu0 0.0
    %124 = vmatpush1.msra.mxu0 0.0
    %125 = vmatprep.subr.mxu0 0.0
    %126 = vmatpush1.msra.mxu0 0.0
    %127 = vmatprep.subr.mxu0 0.0
    %128 = vmatpush1.msra.mxu0 0.0
    %129 = vmatprep.subr.mxu0 0.0
    %130 = vmatpush1.msra.mxu0 0.0
    %131 = vmatprep.subr.mxu0 0.0
    %132 = vmatpush1.msra.mxu0 0.0
    %133 = vmatprep.subr.mxu0 0.0
    %134 = vmatpush1.msra.mxu0 0.0
    %135 = vmatprep.subr.mxu0 0.0
    %136 = vmatpush1.msra.mxu0 0.0
    %137 = vmatprep.subr.mxu0 0.0
    %138 = vmatpush1.msra.mxu0 0.0
    %139 = vmatprep.subr.mxu0 0.0
    %140 = vmatpush1.msra.mxu0 0.0
    %141 = vmatprep.subr.mxu0 0.0
    %142 = vmatpush1.msra.mxu0 0.0
    %143 = vmatprep.subr.mxu0 0.0
    %144 = vmatpush1.msra.mxu0 0.0
    %145 = vmatprep.subr.mxu0 0.0
    %146 = vmatpush1.msra.mxu0 0.0
    %147 = vmatprep.subr.mxu0 0.0
    %148 = vmatpush1.msra.mxu0 0.0
    %149 = vmatprep.subr.mxu0 0.0
    %150 = vmatpush1.msra.mxu0 0.0
    %151 = vmatprep.mubr.f32.mxu0 0.0
    %152 = vmatmul.mubr.f32.gmra.mrb[0].mxu0 %v85
    %v153 = vpop.f32.mrb[0].mxu0
    %v154 = vadd.f32 %v66, %v153
    %v155 = vpop.f32.mrb[0].mxu0
    %156 = vdwg.mxu0
    %157 = vst [vmem:[#allocation3] sm:$0xff] %v154
  $region21: #{run_simulator.1} parent=0 // pred_fallthru
    _
  %v158 = vld [vmem:[#allocation2] sm:$0xff]
  %v159 = vld [vmem:[#allocation3] sm:$0xff]
  %v160 = vadd.f32 %v158, %v159
  %161 = vst [vmem:[%s4] sm:$0xff] %v160
  %v162 = vld [vmem:[%s0] sm:$0xff]
  %v163 = vld [vmem:[%s0 + $0x8] sm:$0xff]
  %164 = vmatprep.subr.mxu0 %v18
  %165 = vmatpush1.msra.mxu0 %v17
  %166 = vmatprep.subr.mxu0 %v20
  %167 = vmatpush1.msra.mxu0 %v19
  %168 = vmatprep.subr.mxu0 %v22
  %169 = vmatpush1.msra.mxu0 %v21
  %170 = vmatprep.subr.mxu0 %v24
  %171 = vmatpush1.msra.mxu0 %v23
  %172 = vmatprep.subr.mxu0 %v26
  %173 = vmatpush1.msra.mxu0 %v25
  %174 = vmatprep.subr.mxu0 %v28
  %175 = vmatpush1.msra.mxu0 %v27
  %176 = vmatprep.subr.mxu0 %v30
  %177 = vmatpush1.msra.mxu0 %v29
  %178 = vmatprep.subr.mxu0 %v32
  %179 = vmatpush1.msra.mxu0 %v31
  %180 = vmatprep.subr.mxu0 %v34
  %181 = vmatpush1.msra.mxu0 %v33
  %182 = vmatprep.subr.mxu0 %v36
  %183 = vmatpush1.msra.mxu0 %v35
  %184 = vmatprep.subr.mxu0 %v38
  %185 = vmatpush1.msra.mxu0 %v37
  %186 = vmatprep.subr.mxu0 %v40
  %187 = vmatpush1.msra.mxu0 %v39
  %188 = vmatprep.subr.mxu0 %v42
  %189 = vmatpush1.msra.mxu0 %v41
  %190 = vmatprep.subr.mxu0 %v44
  %191 = vmatpush1.msra.mxu0 %v43
  %192 = vmatprep.subr.mxu0 %v46
  %193 = vmatpush1.msra.mxu0 %v45
  %194 = vmatprep.subr.mxu0 %v48
  %195 = vmatpush1.msra.mxu0 %v47
  %196 = vmatprep.subr.mxu0 0.0
  %197 = vmatpush1.msra.mxu0 0.0
  %198 = vmatprep.subr.mxu0 0.0
  %199 = vmatpush1.msra.mxu0 0.0
  %200 = vmatprep.subr.mxu0 0.0
  %201 = vmatpush1.msra.mxu0 0.0
  %202 = vmatprep.subr.mxu0 0.0
  %203 = vmatpush1.msra.mxu0 0.0
  %204 = vmatprep.subr.mxu0 0.0
  %205 = vmatpush1.msra.mxu0 0.0
  %206 = vmatprep.subr.mxu0 0.0
  %207 = vmatpush1.msra.mxu0 0.0
  %208 = vmatprep.subr.mxu0 0.0
  %209 = vmatpush1.msra.mxu0 0.0
  %210 = vmatprep.subr.mxu0 0.0
  %211 = vmatpush1.msra.mxu0 0.0
  %212 = vmatprep.subr.mxu0 0.0
  %213 = vmatpush1.msra.mxu0 0.0
  %214 = vmatprep.subr.mxu0 0.0
  %215 = vmatpush1.msra.mxu0 0.0
  %216 = vmatprep.subr.mxu0 0.0
  %217 = vmatpush1.msra.mxu0 0.0
  %218 = vmatprep.subr.mxu0 0.0
  %219 = vmatpush1.msra.mxu0 0.0
  %220 = vmatprep.subr.mxu0 0.0
  %221 = vmatpush1.msra.mxu0 0.0
  %222 = vmatprep.subr.mxu0 0.0
  %223 = vmatpush1.msra.mxu0 0.0
  %224 = vmatprep.subr.mxu0 0.0
  %225 = vmatpush1.msra.mxu0 0.0
  %226 = vmatprep.subr.mxu0 0.0
  %227 = vmatpush1.msra.mxu0 0.0
  %228 = vmatprep.mubr.f32.mxu0 0.0
  %229 = vmatmul.mubr.f32.gmra.mrb[0].mxu0 %v158
  %v230 = vpop.f32.mrb[0].mxu0
  %v231 = vadd.f32 %v162, %v230
  %v232 = vpop.f32.mrb[0].mxu0
  %v233 = vadd.f32 %v163, %v232
  %234 = vdwg.mxu0
  %v235 = vtanh.pop %v231
  %v236 = vtanh.pop %v233
  %v237 = vmul.f32 %v158, %v76
  %v238 = vmul.f32 %v235, %v78
  %v239 = vadd.f32 %v237, %v238
  %v240 = vmul.f32 %v236, %v80
  %v241 = vadd.f32 %v239, %v240
  %v242 = vmax.f32 %v241, %v68
  %v243 = vmin.f32 %v242, %v70
  %244 = vmatprep.subr.mxu0 0.0
  %245 = vmatpush1.msra.mxu0 %v49
  %246 = vmatprep.subr.mxu0 0.0
  %247 = vmatpush1.msra.mxu0 %v50
  %248 = vmatprep.subr.mxu0 0.0
  %249 = vmatpush1.msra.mxu0 %v51
  %250 = vmatprep.subr.mxu0 0.0
  %251 = vmatpush1.msra.mxu0 %v52
  %252 = vmatprep.subr.mxu0 0.0
  %253 = vmatpush1.msra.mxu0 %v53
  %254 = vmatprep.subr.mxu0 0.0
  %255 = vmatpush1.msra.mxu0 %v54
  %256 = vmatprep.subr.mxu0 0.0
  %257 = vmatpush1.msra.mxu0 %v55
  %258 = vmatprep.subr.mxu0 0.0
  %259 = vmatpush1.msra.mxu0 %v56
  %260 = vmatprep.subr.mxu0 0.0
  %261 = vmatpush1.msra.mxu0 %v57
  %262 = vmatprep.subr.mxu0 0.0
  %263 = vmatpush1.msra.mxu0 %v58
  %264 = vmatprep.subr.mxu0 0.0
  %265 = vmatpush1.msra.mxu0 %v59
  %266 = vmatprep.subr.mxu0 0.0
  %267 = vmatpush1.msra.mxu0 %v60
  %268 = vmatprep.subr.mxu0 0.0
  %269 = vmatpush1.msra.mxu0 %v61
  %270 = vmatprep.subr.mxu0 0.0
  %271 = vmatpush1.msra.mxu0 %v62
  %272 = vmatprep.subr.mxu0 0.0
  %273 = vmatpush1.msra.mxu0 %v63
  %274 = vmatprep.subr.mxu0 0.0
  %275 = vmatpush1.msra.mxu0 %v64
  %276 = vmatprep.subr.mxu0 0.0
  %277 = vmatpush1.msra.mxu0 0.0
  %278 = vmatprep.subr.mxu0 0.0
  %279 = vmatpush1.msra.mxu0 0.0
  %280 = vmatprep.subr.mxu0 0.0
  %281 = vmatpush1.msra.mxu0 0.0
  %282 = vmatprep.subr.mxu0 0.0
  %283 = vmatpush1.msra.mxu0 0.0
  %284 = vmatprep.subr.mxu0 0.0
  %285 = vmatpush1.msra.mxu0 0.0
  %286 = vmatprep.subr.mxu0 0.0
  %287 = vmatpush1.msra.mxu0 0.0
  %288 = vmatprep.subr.mxu0 0.0
  %289 = vmatpush1.msra.mxu0 0.0
  %290 = vmatprep.subr.mxu0 0.0
  %291 = vmatpush1.msra.mxu0 0.0
  %292 = vmatprep.subr.mxu0 0.0
  %293 = vmatpush1.msra.mxu0 0.0
  %294 = vmatprep.subr.mxu0 0.0
  %295 = vmatpush1.msra.mxu0 0.0
  %296 = vmatprep.subr.mxu0 0.0
  %297 = vmatpush1.msra.mxu0 0.0
  %298 = vmatprep.subr.mxu0 0.0
  %299 = vmatpush1.msra.mxu0 0.0
  %300 = vmatprep.subr.mxu0 0.0
  %301 = vmatpush1.msra.mxu0 0.0
  %302 = vmatprep.subr.mxu0 0.0
  %303 = vmatpush1.msra.mxu0 0.0
  %304 = vmatprep.subr.mxu0 0.0
  %305 = vmatpush1.msra.mxu0 0.0
  %306 = vmatprep.subr.mxu0 0.0
  %307 = vmatpush1.msra.mxu0 0.0
  %308 = vmatprep.mubr.f32.mxu0 0.0
  %309 = vmatmul.mubr.f32.gmra.mrb[0].mxu0 %v241
  %v310 = vpop.f32.mrb[0].mxu0
  %v311 = vadd.f32 %v66, %v310
  %v312 = vpop.f32.mrb[0].mxu0
  %313 = vdwg.mxu0
  %v314 = vmax.f32 %v311, %v72
  %v315 = vmin.f32 %v314, %v74
  %v316 = vadd.f32 %v243, %v315
  %s317 = scalar_lea.vmem %s4, 8
  %318 = vst [vmem:[%s317] sm:$0xff] %v316
  %s319 = scalar_lea.vmem %s0, 16
  %v320 = vld [vmem:[%s319] sm:$0xff]
  %v321 = vld [vmem:[%s319 + $0x8] sm:$0xff]
  %322 = vmatprep.subr.mxu0 %v18
  %323 = vmatpush1.msra.mxu0 %v17
  %324 = vmatprep.subr.mxu0 %v20
  %325 = vmatpush1.msra.mxu0 %v19
  %326 = vmatprep.subr.mxu0 %v22
  %327 = vmatpush1.msra.mxu0 %v21
  %328 = vmatprep.subr.mxu0 %v24
  %329 = vmatpush1.msra.mxu0 %v23
  %330 = vmatprep.subr.mxu0 %v26
  %331 = vmatpush1.msra.mxu0 %v25
  %332 = vmatprep.subr.mxu0 %v28
  %333 = vmatpush1.msra.mxu0 %v27
  %334 = vmatprep.subr.mxu0 %v30
  %335 = vmatpush1.msra.mxu0 %v29
  %336 = vmatprep.subr.mxu0 %v32
  %337 = vmatpush1.msra.mxu0 %v31
  %338 = vmatprep.subr.mxu0 %v34
  %339 = vmatpush1.msra.mxu0 %v33
  %340 = vmatprep.subr.mxu0 %v36
  %341 = vmatpush1.msra.mxu0 %v35
  %342 = vmatprep.subr.mxu0 %v38
  %343 = vmatpush1.msra.mxu0 %v37
  %344 = vmatprep.subr.mxu0 %v40
  %345 = vmatpush1.msra.mxu0 %v39
  %346 = vmatprep.subr.mxu0 %v42
  %347 = vmatpush1.msra.mxu0 %v41
  %348 = vmatprep.subr.mxu0 %v44
  %349 = vmatpush1.msra.mxu0 %v43
  %350 = vmatprep.subr.mxu0 %v46
  %351 = vmatpush1.msra.mxu0 %v45
  %352 = vmatprep.subr.mxu0 %v48
  %353 = vmatpush1.msra.mxu0 %v47
  %354 = vmatprep.subr.mxu0 0.0
  %355 = vmatpush1.msra.mxu0 0.0
  %356 = vmatprep.subr.mxu0 0.0
  %357 = vmatpush1.msra.mxu0 0.0
  %358 = vmatprep.subr.mxu0 0.0
  %359 = vmatpush1.msra.mxu0 0.0
  %360 = vmatprep.subr.mxu0 0.0
  %361 = vmatpush1.msra.mxu0 0.0
  %362 = vmatprep.subr.mxu0 0.0
  %363 = vmatpush1.msra.mxu0 0.0
  %364 = vmatprep.subr.mxu0 0.0
  %365 = vmatpush1.msra.mxu0 0.0
  %366 = vmatprep.subr.mxu0 0.0
  %367 = vmatpush1.msra.mxu0 0.0
  %368 = vmatprep.subr.mxu0 0.0
  %369 = vmatpush1.msra.mxu0 0.0
  %370 = vmatprep.subr.mxu0 0.0
  %371 = vmatpush1.msra.mxu0 0.0
  %372 = vmatprep.subr.mxu0 0.0
  %373 = vmatpush1.msra.mxu0 0.0
  %374 = vmatprep.subr.mxu0 0.0
  %375 = vmatpush1.msra.mxu0 0.0
  %376 = vmatprep.subr.mxu0 0.0
  %377 = vmatpush1.msra.mxu0 0.0
  %378 = vmatprep.subr.mxu0 0.0
  %379 = vmatpush1.msra.mxu0 0.0
  %380 = vmatprep.subr.mxu0 0.0
  %381 = vmatpush1.msra.mxu0 0.0
  %382 = vmatprep.subr.mxu0 0.0
  %383 = vmatpush1.msra.mxu0 0.0
  %384 = vmatprep.subr.mxu0 0.0
  %385 = vmatpush1.msra.mxu0 0.0
  %386 = vmatprep.mubr.f32.mxu0 0.0
  %387 = vmatmul.mubr.f32.gmra.mrb[0].mxu0 %v243
  %v388 = vpop.f32.mrb[0].mxu0
  %v389 = vadd.f32 %v320, %v388
  %v390 = vpop.f32.mrb[0].mxu0
  %v391 = vadd.f32 %v321, %v390
  %392 = vdwg.mxu0
  %v393 = vtanh.pop %v389
  %v394 = vtanh.pop %v391
  %v395 = vmul.f32 %v243, %v76
  %v396 = vmul.f32 %v393, %v78
  %v397 = vadd.f32 %v395, %v396
  %v398 = vmul.f32 %v394, %v80
  %v399 = vadd.f32 %v397, %v398
  %v400 = vmax.f32 %v399, %v68
  %v401 = vmin.f32 %v400, %v70
  %402 = vmatprep.subr.mxu0 0.0
  %403 = vmatpush1.msra.mxu0 %v49
  %404 = vmatprep.subr.mxu0 0.0
  %405 = vmatpush1.msra.mxu0 %v50
  %406 = vmatprep.subr.mxu0 0.0
  %407 = vmatpush1.msra.mxu0 %v51
  %408 = vmatprep.subr.mxu0 0.0
  %409 = vmatpush1.msra.mxu0 %v52
  %410 = vmatprep.subr.mxu0 0.0
  %411 = vmatpush1.msra.mxu0 %v53
  %412 = vmatprep.subr.mxu0 0.0
  %413 = vmatpush1.msra.mxu0 %v54
  %414 = vmatprep.subr.mxu0 0.0
  %415 = vmatpush1.msra.mxu0 %v55
  %416 = vmatprep.subr.mxu0 0.0
  %417 = vmatpush1.msra.mxu0 %v56
  %418 = vmatprep.subr.mxu0 0.0
  %419 = vmatpush1.msra.mxu0 %v57
  %420 = vmatprep.subr.mxu0 0.0
  %421 = vmatpush1.msra.mxu0 %v58
  %422 = vmatprep.subr.mxu0 0.0
  %423 = vmatpush1.msra.mxu0 %v59
  %424 = vmatprep.subr.mxu0 0.0
  %425 = vmatpush1.msra.mxu0 %v60
  %426 = vmatprep.subr.mxu0 0.0
  %427 = vmatpush1.msra.mxu0 %v61
  %428 = vmatprep.subr.mxu0 0.0
  %429 = vmatpush1.msra.mxu0 %v62
  %430 = vmatprep.subr.mxu0 0.0
  %431 = vmatpush1.msra.mxu0 %v63
  %432 = vmatprep.subr.mxu0 0.0
  %433 = vmatpush1.msra.mxu0 %v64
  %434 = vmatprep.subr.mxu0 0.0
  %435 = vmatpush1.msra.mxu0 0.0
  %436 = vmatprep.subr.mxu0 0.0
  %437 = vmatpush1.msra.mxu0 0.0
  %438 = vmatprep.subr.mxu0 0.0
  %439 = vmatpush1.msra.mxu0 0.0
  %440 = vmatprep.subr.mxu0 0.0
  %441 = vmatpush1.msra.mxu0 0.0
  %442 = vmatprep.subr.mxu0 0.0
  %443 = vmatpush1.msra.mxu0 0.0
  %444 = vmatprep.subr.mxu0 0.0
  %445 = vmatpush1.msra.mxu0 0.0
  %446 = vmatprep.subr.mxu0 0.0
  %447 = vmatpush1.msra.mxu0 0.0
  %448 = vmatprep.subr.mxu0 0.0
  %449 = vmatpush1.msra.mxu0 0.0
  %450 = vmatprep.subr.mxu0 0.0
  %451 = vmatpush1.msra.mxu0 0.0
  %452 = vmatprep.subr.mxu0 0.0
  %453 = vmatpush1.msra.mxu0 0.0
  %454 = vmatprep.subr.mxu0 0.0
  %455 = vmatpush1.msra.mxu0 0.0
  %456 = vmatprep.subr.mxu0 0.0
  %457 = vmatpush1.msra.mxu0 0.0
  %458 = vmatprep.subr.mxu0 0.0
  %459 = vmatpush1.msra.mxu0 0.0
  %460 = vmatprep.subr.mxu0 0.0
  %461 = vmatpush1.msra.mxu0 0.0
  %462 = vmatprep.subr.mxu0 0.0
  %463 = vmatpush1.msra.mxu0 0.0
  %464 = vmatprep.subr.mxu0 0.0
  %465 = vmatpush1.msra.mxu0 0.0
  %466 = vmatprep.mubr.f32.mxu0 0.0
  %467 = vmatmul.mubr.f32.gmra.mrb[0].mxu0 %v399
  %v468 = vpop.f32.mrb[0].mxu0
  %v469 = vadd.f32 %v66, %v468
  %v470 = vpop.f32.mrb[0].mxu0
  %471 = vdwg.mxu0
  %v472 = vmax.f32 %v469, %v72
  %v473 = vmin.f32 %v472, %v74
  %v474 = vadd.f32 %v401, %v473
  %s475 = scalar_lea.vmem %s4, 16
  %476 = vst [vmem:[%s475] sm:$0xff] %v474
  %s477 = scalar_lea.vmem %s0, 32
  %v478 = vld [vmem:[%s477] sm:$0xff]
  %v479 = vld [vmem:[%s477 + $0x8] sm:$0xff]
  %480 = vmatprep.subr.mxu0 %v18
  %481 = vmatpush1.msra.mxu0 %v17
  %482 = vmatprep.subr.mxu0 %v20
  %483 = vmatpush1.msra.mxu0 %v19
  %484 = vmatprep.subr.mxu0 %v22
  %485 = vmatpush1.msra.mxu0 %v21
  %486 = vmatprep.subr.mxu0 %v24
  %487 = vmatpush1.msra.mxu0 %v23
  %488 = vmatprep.subr.mxu0 %v26
  %489 = vmatpush1.msra.mxu0 %v25
  %490 = vmatprep.subr.mxu0 %v28
  %491 = vmatpush1.msra.mxu0 %v27
  %492 = vmatprep.subr.mxu0 %v30
  %493 = vmatpush1.msra.mxu0 %v29
  %494 = vmatprep.subr.mxu0 %v32
  %495 = vmatpush1.msra.mxu0 %v31
  %496 = vmatprep.subr.mxu0 %v34
  %497 = vmatpush1.msra.mxu0 %v33
  %498 = vmatprep.subr.mxu0 %v36
  %499 = vmatpush1.msra.mxu0 %v35
  %500 = vmatprep.subr.mxu0 %v38
  %501 = vmatpush1.msra.mxu0 %v37
  %502 = vmatprep.subr.mxu0 %v40
  %503 = vmatpush1.msra.mxu0 %v39
  %504 = vmatprep.subr.mxu0 %v42
  %505 = vmatpush1.msra.mxu0 %v41
  %506 = vmatprep.subr.mxu0 %v44
  %507 = vmatpush1.msra.mxu0 %v43
  %508 = vmatprep.subr.mxu0 %v46
  %509 = vmatpush1.msra.mxu0 %v45
  %510 = vmatprep.subr.mxu0 %v48
  %511 = vmatpush1.msra.mxu0 %v47
  %512 = vmatprep.subr.mxu0 0.0
  %513 = vmatpush1.msra.mxu0 0.0
  %514 = vmatprep.subr.mxu0 0.0
  %515 = vmatpush1.msra.mxu0 0.0
  %516 = vmatprep.subr.mxu0 0.0
  %517 = vmatpush1.msra.mxu0 0.0
  %518 = vmatprep.subr.mxu0 0.0
  %519 = vmatpush1.msra.mxu0 0.0
  %520 = vmatprep.subr.mxu0 0.0
  %521 = vmatpush1.msra.mxu0 0.0
  %522 = vmatprep.subr.mxu0 0.0
  %523 = vmatpush1.msra.mxu0 0.0
  %524 = vmatprep.subr.mxu0 0.0
  %525 = vmatpush1.msra.mxu0 0.0
  %526 = vmatprep.subr.mxu0 0.0
  %527 = vmatpush1.msra.mxu0 0.0
  %528 = vmatprep.subr.mxu0 0.0
  %529 = vmatpush1.msra.mxu0 0.0
  %530 = vmatprep.subr.mxu0 0.0
  %531 = vmatpush1.msra.mxu0 0.0
  %532 = vmatprep.subr.mxu0 0.0
  %533 = vmatpush1.msra.mxu0 0.0
  %534 = vmatprep.subr.mxu0 0.0
  %535 = vmatpush1.msra.mxu0 0.0
  %536 = vmatprep.subr.mxu0 0.0
  %537 = vmatpush1.msra.mxu0 0.0
  %538 = vmatprep.subr.mxu0 0.0
  %539 = vmatpush1.msra.mxu0 0.0
  %540 = vmatprep.subr.mxu0 0.0
  %541 = vmatpush1.msra.mxu0 0.0
  %542 = vmatprep.subr.mxu0 0.0
  %543 = vmatpush1.msra.mxu0 0.0
  %544 = vmatprep.mubr.f32.mxu0 0.0
  %545 = vmatmul.mubr.f32.gmra.mrb[0].mxu0 %v401
  %v546 = vpop.f32.mrb[0].mxu0
  %v547 = vadd.f32 %v478, %v546
  %v548 = vpop.f32.mrb[0].mxu0
  %v549 = vadd.f32 %v479, %v548
  %550 = vdwg.mxu0
  %v551 = vtanh.pop %v547
  %v552 = vtanh.pop %v549
  %v553 = vmul.f32 %v401, %v76
  %v554 = vmul.f32 %v551, %v78
  %v555 = vadd.f32 %v553, %v554
  %v556 = vmul.f32 %v552, %v80
  %v557 = vadd.f32 %v555, %v556
  %v558 = vmax.f32 %v557, %v68
  %v559 = vmin.f32 %v558, %v70
  %560 = vmatprep.subr.mxu0 0.0
  %561 = vmatpush1.msra.mxu0 %v49
  %562 = vmatprep.subr.mxu0 0.0
  %563 = vmatpush1.msra.mxu0 %v50
  %564 = vmatprep.subr.mxu0 0.0
  %565 = vmatpush1.msra.mxu0 %v51
  %566 = vmatprep.subr.mxu0 0.0
  %567 = vmatpush1.msra.mxu0 %v52
  %568 = vmatprep.subr.mxu0 0.0
  %569 = vmatpush1.msra.mxu0 %v53
  %570 = vmatprep.subr.mxu0 0.0
  %571 = vmatpush1.msra.mxu0 %v54
  %572 = vmatprep.subr.mxu0 0.0
  %573 = vmatpush1.msra.mxu0 %v55
  %574 = vmatprep.subr.mxu0 0.0
  %575 = vmatpush1.msra.mxu0 %v56
  %576 = vmatprep.subr.mxu0 0.0
  %577 = vmatpush1.msra.mxu0 %v57
  %578 = vmatprep.subr.mxu0 0.0
  %579 = vmatpush1.msra.mxu0 %v58
  %580 = vmatprep.subr.mxu0 0.0
  %581 = vmatpush1.msra.mxu0 %v59
  %582 = vmatprep.subr.mxu0 0.0
  %583 = vmatpush1.msra.mxu0 %v60
  %584 = vmatprep.subr.mxu0 0.0
  %585 = vmatpush1.msra.mxu0 %v61
  %586 = vmatprep.subr.mxu0 0.0
  %587 = vmatpush1.msra.mxu0 %v62
  %588 = vmatprep.subr.mxu0 0.0
  %589 = vmatpush1.msra.mxu0 %v63
  %590 = vmatprep.subr.mxu0 0.0
  %591 = vmatpush1.msra.mxu0 %v64
  %592 = vmatprep.subr.mxu0 0.0
  %593 = vmatpush1.msra.mxu0 0.0
  %594 = vmatprep.subr.mxu0 0.0
  %595 = vmatpush1.msra.mxu0 0.0
  %596 = vmatprep.subr.mxu0 0.0
  %597 = vmatpush1.msra.mxu0 0.0
  %598 = vmatprep.subr.mxu0 0.0
  %599 = vmatpush1.msra.mxu0 0.0
  %600 = vmatprep.subr.mxu0 0.0
  %601 = vmatpush1.msra.mxu0 0.0
  %602 = vmatprep.subr.mxu0 0.0
  %603 = vmatpush1.msra.mxu0 0.0
  %604 = vmatprep.subr.mxu0 0.0
  %605 = vmatpush1.msra.mxu0 0.0
  %606 = vmatprep.subr.mxu0 0.0
  %607 = vmatpush1.msra.mxu0 0.0
  %608 = vmatprep.subr.mxu0 0.0
  %609 = vmatpush1.msra.mxu0 0.0
  %610 = vmatprep.subr.mxu0 0.0
  %611 = vmatpush1.msra.mxu0 0.0
  %612 = vmatprep.subr.mxu0 0.0
  %613 = vmatpush1.msra.mxu0 0.0
  %614 = vmatprep.subr.mxu0 0.0
  %615 = vmatpush1.msra.mxu0 0.0
  %616 = vmatprep.subr.mxu0 0.0
  %617 = vmatpush1.msra.mxu0 0.0
  %618 = vmatprep.subr.mxu0 0.0
  %619 = vmatpush1.msra.mxu0 0.0
  %620 = vmatprep.subr.mxu0 0.0
  %621 = vmatpush1.msra.mxu0 0.0
  %622 = vmatprep.subr.mxu0 0.0
  %623 = vmatpush1.msra.mxu0 0.0
  %624 = vmatprep.mubr.f32.mxu0 0.0
  %625 = vmatmul.mubr.f32.gmra.mrb[0].mxu0 %v557
  %v626 = vpop.f32.mrb[0].mxu0
  %v627 = vadd.f32 %v66, %v626
  %v628 = vpop.f32.mrb[0].mxu0
  %629 = vdwg.mxu0
  %v630 = vmax.f32 %v627, %v72
  %v631 = vmin.f32 %v630, %v74
  %v632 = vadd.f32 %v559, %v631
  %s633 = scalar_lea.vmem %s4, 24
  %634 = vst [vmem:[%s633] sm:$0xff] %v632
  %s635 = scalar_lea.vmem %s0, 48
  %v636 = vld [vmem:[%s635] sm:$0xff]
  %v637 = vld [vmem:[%s635 + $0x8] sm:$0xff]
  %638 = vmatprep.subr.mxu0 %v18
  %639 = vmatpush1.msra.mxu0 %v17
  %640 = vmatprep.subr.mxu0 %v20
  %641 = vmatpush1.msra.mxu0 %v19
  %642 = vmatprep.subr.mxu0 %v22
  %643 = vmatpush1.msra.mxu0 %v21
  %644 = vmatprep.subr.mxu0 %v24
  %645 = vmatpush1.msra.mxu0 %v23
  %646 = vmatprep.subr.mxu0 %v26
  %647 = vmatpush1.msra.mxu0 %v25
  %648 = vmatprep.subr.mxu0 %v28
  %649 = vmatpush1.msra.mxu0 %v27
  %650 = vmatprep.subr.mxu0 %v30
  %651 = vmatpush1.msra.mxu0 %v29
  %652 = vmatprep.subr.mxu0 %v32
  %653 = vmatpush1.msra.mxu0 %v31
  %654 = vmatprep.subr.mxu0 %v34
  %655 = vmatpush1.msra.mxu0 %v33
  %656 = vmatprep.subr.mxu0 %v36
  %657 = vmatpush1.msra.mxu0 %v35
  %658 = vmatprep.subr.mxu0 %v38
  %659 = vmatpush1.msra.mxu0 %v37
  %660 = vmatprep.subr.mxu0 %v40
  %661 = vmatpush1.msra.mxu0 %v39
  %662 = vmatprep.subr.mxu0 %v42
  %663 = vmatpush1.msra.mxu0 %v41
  %664 = vmatprep.subr.mxu0 %v44
  %665 = vmatpush1.msra.mxu0 %v43
  %666 = vmatprep.subr.mxu0 %v46
  %667 = vmatpush1.msra.mxu0 %v45
  %668 = vmatprep.subr.mxu0 %v48
  %669 = vmatpush1.msra.mxu0 %v47
  %670 = vmatprep.subr.mxu0 0.0
  %671 = vmatpush1.msra.mxu0 0.0
  %672 = vmatprep.subr.mxu0 0.0
  %673 = vmatpush1.msra.mxu0 0.0
  %674 = vmatprep.subr.mxu0 0.0
  %675 = vmatpush1.msra.mxu0 0.0
  %676 = vmatprep.subr.mxu0 0.0
  %677 = vmatpush1.msra.mxu0 0.0
  %678 = vmatprep.subr.mxu0 0.0
  %679 = vmatpush1.msra.mxu0 0.0
  %680 = vmatprep.subr.mxu0 0.0
  %681 = vmatpush1.msra.mxu0 0.0
  %682 = vmatprep.subr.mxu0 0.0
  %683 = vmatpush1.msra.mxu0 0.0
  %684 = vmatprep.subr.mxu0 0.0
  %685 = vmatpush1.msra.mxu0 0.0
  %686 = vmatprep.subr.mxu0 0.0
  %687 = vmatpush1.msra.mxu0 0.0
  %688 = vmatprep.subr.mxu0 0.0
  %689 = vmatpush1.msra.mxu0 0.0
  %690 = vmatprep.subr.mxu0 0.0
  %691 = vmatpush1.msra.mxu0 0.0
  %692 = vmatprep.subr.mxu0 0.0
  %693 = vmatpush1.msra.mxu0 0.0
  %694 = vmatprep.subr.mxu0 0.0
  %695 = vmatpush1.msra.mxu0 0.0
  %696 = vmatprep.subr.mxu0 0.0
  %697 = vmatpush1.msra.mxu0 0.0
  %698 = vmatprep.subr.mxu0 0.0
  %699 = vmatpush1.msra.mxu0 0.0
  %700 = vmatprep.subr.mxu0 0.0
  %701 = vmatpush1.msra.mxu0 0.0
  %702 = vmatprep.mubr.f32.mxu0 0.0
  %703 = vmatmul.mubr.f32.gmra.mrb[0].mxu0 %v559
  %v704 = vpop.f32.mrb[0].mxu0
  %v705 = vadd.f32 %v636, %v704
  %v706 = vpop.f32.mrb[0].mxu0
  %v707 = vadd.f32 %v637, %v706
  %708 = vdwg.mxu0
  %v709 = vtanh.pop %v705
  %v710 = vtanh.pop %v707
  %v711 = vmul.f32 %v559, %v76
  %v712 = vmul.f32 %v709, %v78
  %v713 = vadd.f32 %v711, %v712
  %v714 = vmul.f32 %v710, %v80
  %v715 = vadd.f32 %v713, %v714
  %v716 = vmax.f32 %v715, %v68
  %v717 = vmin.f32 %v716, %v70
  %718 = vmatprep.subr.mxu0 0.0
  %719 = vmatpush1.msra.mxu0 %v49
  %720 = vmatprep.subr.mxu0 0.0
  %721 = vmatpush1.msra.mxu0 %v50
  %722 = vmatprep.subr.mxu0 0.0
  %723 = vmatpush1.msra.mxu0 %v51
  %724 = vmatprep.subr.mxu0 0.0
  %725 = vmatpush1.msra.mxu0 %v52
  %726 = vmatprep.subr.mxu0 0.0
  %727 = vmatpush1.msra.mxu0 %v53
  %728 = vmatprep.subr.mxu0 0.0
  %729 = vmatpush1.msra.mxu0 %v54
  %730 = vmatprep.subr.mxu0 0.0
  %731 = vmatpush1.msra.mxu0 %v55
  %732 = vmatprep.subr.mxu0 0.0
  %733 = vmatpush1.msra.mxu0 %v56
  %734 = vmatprep.subr.mxu0 0.0
  %735 = vmatpush1.msra.mxu0 %v57
  %736 = vmatprep.subr.mxu0 0.0
  %737 = vmatpush1.msra.mxu0 %v58
  %738 = vmatprep.subr.mxu0 0.0
  %739 = vmatpush1.msra.mxu0 %v59
  %740 = vmatprep.subr.mxu0 0.0
  %741 = vmatpush1.msra.mxu0 %v60
  %742 = vmatprep.subr.mxu0 0.0
  %743 = vmatpush1.msra.mxu0 %v61
  %744 = vmatprep.subr.mxu0 0.0
  %745 = vmatpush1.msra.mxu0 %v62
  %746 = vmatprep.subr.mxu0 0.0
  %747 = vmatpush1.msra.mxu0 %v63
  %748 = vmatprep.subr.mxu0 0.0
  %749 = vmatpush1.msra.mxu0 %v64
  %750 = vmatprep.subr.mxu0 0.0
  %751 = vmatpush1.msra.mxu0 0.0
  %752 = vmatprep.subr.mxu0 0.0
  %753 = vmatpush1.msra.mxu0 0.0
  %754 = vmatprep.subr.mxu0 0.0
  %755 = vmatpush1.msra.mxu0 0.0
  %756 = vmatprep.subr.mxu0 0.0
  %757 = vmatpush1.msra.mxu0 0.0
  %758 = vmatprep.subr.mxu0 0.0
  %759 = vmatpush1.msra.mxu0 0.0
  %760 = vmatprep.subr.mxu0 0.0
  %761 = vmatpush1.msra.mxu0 0.0
  %762 = vmatprep.subr.mxu0 0.0
  %763 = vmatpush1.msra.mxu0 0.0
  %764 = vmatprep.subr.mxu0 0.0
  %765 = vmatpush1.msra.mxu0 0.0
  %766 = vmatprep.subr.mxu0 0.0
  %767 = vmatpush1.msra.mxu0 0.0
  %768 = vmatprep.subr.mxu0 0.0
  %769 = vmatpush1.msra.mxu0 0.0
  %770 = vmatprep.subr.mxu0 0.0
  %771 = vmatpush1.msra.mxu0 0.0
  %772 = vmatprep.subr.mxu0 0.0
  %773 = vmatpush1.msra.mxu0 0.0
  %774 = vmatprep.subr.mxu0 0.0
  %775 = vmatpush1.msra.mxu0 0.0
  %776 = vmatprep.subr.mxu0 0.0
  %777 = vmatpush1.msra.mxu0 0.0
  %778 = vmatprep.subr.mxu0 0.0
  %779 = vmatpush1.msra.mxu0 0.0
  %780 = vmatprep.subr.mxu0 0.0
  %781 = vmatpush1.msra.mxu0 0.0
  %782 = vmatprep.mubr.f32.mxu0 0.0
  %783 = vmatmul.mubr.f32.gmra.mrb[0].mxu0 %v715
  %v784 = vpop.f32.mrb[0].mxu0
  %v785 = vadd.f32 %v66, %v784
  %v786 = vpop.f32.mrb[0].mxu0
  %787 = vdwg.mxu0
  %v788 = vmax.f32 %v785, %v72
  %v789 = vmin.f32 %v788, %v74
  %v790 = vadd.f32 %v717, %v789
  %s791 = scalar_lea.vmem %s4, 32
  %792 = vst [vmem:[%s791] sm:$0xff] %v790
  %s793 = scalar_lea.vmem %s0, 64
  %v794 = vld [vmem:[%s793] sm:$0xff]
  %v795 = vld [vmem:[%s793 + $0x8] sm:$0xff]
  %796 = vmatprep.subr.mxu0 %v18
  %797 = vmatpush1.msra.mxu0 %v17
  %798 = vmatprep.subr.mxu0 %v20
  %799 = vmatpush1.msra.mxu0 %v19
  %800 = vmatprep.subr.mxu0 %v22
  %801 = vmatpush1.msra.mxu0 %v21
  %802 = vmatprep.subr.mxu0 %v24
  %803 = vmatpush1.msra.mxu0 %v23
  %804 = vmatprep.subr.mxu0 %v26
  %805 = vmatpush1.msra.mxu0 %v25
  %806 = vmatprep.subr.mxu0 %v28
  %807 = vmatpush1.msra.mxu0 %v27
  %808 = vmatprep.subr.mxu0 %v30
  %809 = vmatpush1.msra.mxu0 %v29
  %810 = vmatprep.subr.mxu0 %v32
  %811 = vmatpush1.msra.mxu0 %v31
  %812 = vmatprep.subr.mxu0 %v34
  %813 = vmatpush1.msra.mxu0 %v33
  %814 = vmatprep.subr.mxu0 %v36
  %815 = vmatpush1.msra.mxu0 %v35
  %816 = vmatprep.subr.mxu0 %v38
  %817 = vmatpush1.msra.mxu0 %v37
  %818 = vmatprep.subr.mxu0 %v40
  %819 = vmatpush1.msra.mxu0 %v39
  %820 = vmatprep.subr.mxu0 %v42
  %821 = vmatpush1.msra.mxu0 %v41
  %822 = vmatprep.subr.mxu0 %v44
  %823 = vmatpush1.msra.mxu0 %v43
  %824 = vmatprep.subr.mxu0 %v46
  %825 = vmatpush1.msra.mxu0 %v45
  %826 = vmatprep.subr.mxu0 %v48
  %827 = vmatpush1.msra.mxu0 %v47
  %828 = vmatprep.subr.mxu0 0.0
  %829 = vmatpush1.msra.mxu0 0.0
  %830 = vmatprep.subr.mxu0 0.0
  %831 = vmatpush1.msra.mxu0 0.0
  %832 = vmatprep.subr.mxu0 0.0
  %833 = vmatpush1.msra.mxu0 0.0
  %834 = vmatprep.subr.mxu0 0.0
  %835 = vmatpush1.msra.mxu0 0.0
  %836 = vmatprep.subr.mxu0 0.0
  %837 = vmatpush1.msra.mxu0 0.0
  %838 = vmatprep.subr.mxu0 0.0
  %839 = vmatpush1.msra.mxu0 0.0
  %840 = vmatprep.subr.mxu0 0.0
  %841 = vmatpush1.msra.mxu0 0.0
  %842 = vmatprep.subr.mxu0 0.0
  %843 = vmatpush1.msra.mxu0 0.0
  %844 = vmatprep.subr.mxu0 0.0
  %845 = vmatpush1.msra.mxu0 0.0
  %846 = vmatprep.subr.mxu0 0.0
  %847 = vmatpush1.msra.mxu0 0.0
  %848 = vmatprep.subr.mxu0 0.0
  %849 = vmatpush1.msra.mxu0 0.0
  %850 = vmatprep.subr.mxu0 0.0
  %851 = vmatpush1.msra.mxu0 0.0
  %852 = vmatprep.subr.mxu0 0.0
  %853 = vmatpush1.msra.mxu0 0.0
  %854 = vmatprep.subr.mxu0 0.0
  %855 = vmatpush1.msra.mxu0 0.0
  %856 = vmatprep.subr.mxu0 0.0
  %857 = vmatpush1.msra.mxu0 0.0
  %858 = vmatprep.subr.mxu0 0.0
  %859 = vmatpush1.msra.mxu0 0.0
  %860 = vmatprep.mubr.f32.mxu0 0.0
  %861 = vmatmul.mubr.f32.gmra.mrb[0].mxu0 %v717
  %v862 = vpop.f32.mrb[0].mxu0
  %v863 = vadd.f32 %v794, %v862
  %v864 = vpop.f32.mrb[0].mxu0
  %v865 = vadd.f32 %v795, %v864
  %866 = vdwg.mxu0
  %v867 = vtanh.pop %v863
  %v868 = vtanh.pop %v865
  %v869 = vmul.f32 %v717, %v76
  %v870 = vmul.f32 %v867, %v78
  %v871 = vadd.f32 %v869, %v870
  %v872 = vmul.f32 %v868, %v80
  %v873 = vadd.f32 %v871, %v872
  %v874 = vmax.f32 %v873, %v68
  %v875 = vmin.f32 %v874, %v70
  %876 = vmatprep.subr.mxu0 0.0
  %877 = vmatpush1.msra.mxu0 %v49
  %878 = vmatprep.subr.mxu0 0.0
  %879 = vmatpush1.msra.mxu0 %v50
  %880 = vmatprep.subr.mxu0 0.0
  %881 = vmatpush1.msra.mxu0 %v51
  %882 = vmatprep.subr.mxu0 0.0
  %883 = vmatpush1.msra.mxu0 %v52
  %884 = vmatprep.subr.mxu0 0.0
  %885 = vmatpush1.msra.mxu0 %v53
  %886 = vmatprep.subr.mxu0 0.0
  %887 = vmatpush1.msra.mxu0 %v54
  %888 = vmatprep.subr.mxu0 0.0
  %889 = vmatpush1.msra.mxu0 %v55
  %890 = vmatprep.subr.mxu0 0.0
  %891 = vmatpush1.msra.mxu0 %v56
  %892 = vmatprep.subr.mxu0 0.0
  %893 = vmatpush1.msra.mxu0 %v57
  %894 = vmatprep.subr.mxu0 0.0
  %895 = vmatpush1.msra.mxu0 %v58
  %896 = vmatprep.subr.mxu0 0.0
  %897 = vmatpush1.msra.mxu0 %v59
  %898 = vmatprep.subr.mxu0 0.0
  %899 = vmatpush1.msra.mxu0 %v60
  %900 = vmatprep.subr.mxu0 0.0
  %901 = vmatpush1.msra.mxu0 %v61
  %902 = vmatprep.subr.mxu0 0.0
  %903 = vmatpush1.msra.mxu0 %v62
  %904 = vmatprep.subr.mxu0 0.0
  %905 = vmatpush1.msra.mxu0 %v63
  %906 = vmatprep.subr.mxu0 0.0
  %907 = vmatpush1.msra.mxu0 %v64
  %908 = vmatprep.subr.mxu0 0.0
  %909 = vmatpush1.msra.mxu0 0.0
  %910 = vmatprep.subr.mxu0 0.0
  %911 = vmatpush1.msra.mxu0 0.0
  %912 = vmatprep.subr.mxu0 0.0
  %913 = vmatpush1.msra.mxu0 0.0
  %914 = vmatprep.subr.mxu0 0.0
  %915 = vmatpush1.msra.mxu0 0.0
  %916 = vmatprep.subr.mxu0 0.0
  %917 = vmatpush1.msra.mxu0 0.0
  %918 = vmatprep.subr.mxu0 0.0
  %919 = vmatpush1.msra.mxu0 0.0
  %920 = vmatprep.subr.mxu0 0.0
  %921 = vmatpush1.msra.mxu0 0.0
  %922 = vmatprep.subr.mxu0 0.0
  %923 = vmatpush1.msra.mxu0 0.0
  %924 = vmatprep.subr.mxu0 0.0
  %925 = vmatpush1.msra.mxu0 0.0
  %926 = vmatprep.subr.mxu0 0.0
  %927 = vmatpush1.msra.mxu0 0.0
  %928 = vmatprep.subr.mxu0 0.0
  %929 = vmatpush1.msra.mxu0 0.0
  %930 = vmatprep.subr.mxu0 0.0
  %931 = vmatpush1.msra.mxu0 0.0
  %932 = vmatprep.subr.mxu0 0.0
  %933 = vmatpush1.msra.mxu0 0.0
  %934 = vmatprep.subr.mxu0 0.0
  %935 = vmatpush1.msra.mxu0 0.0
  %936 = vmatprep.subr.mxu0 0.0
  %937 = vmatpush1.msra.mxu0 0.0
  %938 = vmatprep.subr.mxu0 0.0
  %939 = vmatpush1.msra.mxu0 0.0
  %940 = vmatprep.mubr.f32.mxu0 0.0
  %941 = vmatmul.mubr.f32.gmra.mrb[0].mxu0 %v873
  %v942 = vpop.f32.mrb[0].mxu0
  %v943 = vadd.f32 %v66, %v942
  %v944 = vpop.f32.mrb[0].mxu0
  %945 = vdwg.mxu0
  %v946 = vmax.f32 %v943, %v72
  %v947 = vmin.f32 %v946, %v74
  %v948 = vadd.f32 %v875, %v947
  %s949 = scalar_lea.vmem %s4, 40
  %950 = vst [vmem:[%s949] sm:$0xff] %v948
  %s951 = scalar_lea.vmem %s0, 80
  %v952 = vld [vmem:[%s951] sm:$0xff]
  %v953 = vld [vmem:[%s951 + $0x8] sm:$0xff]
  %954 = vmatprep.subr.mxu0 %v18
  %955 = vmatpush1.msra.mxu0 %v17
  %956 = vmatprep.subr.mxu0 %v20
  %957 = vmatpush1.msra.mxu0 %v19
  %958 = vmatprep.subr.mxu0 %v22
  %959 = vmatpush1.msra.mxu0 %v21
  %960 = vmatprep.subr.mxu0 %v24
  %961 = vmatpush1.msra.mxu0 %v23
  %962 = vmatprep.subr.mxu0 %v26
  %963 = vmatpush1.msra.mxu0 %v25
  %964 = vmatprep.subr.mxu0 %v28
  %965 = vmatpush1.msra.mxu0 %v27
  %966 = vmatprep.subr.mxu0 %v30
  %967 = vmatpush1.msra.mxu0 %v29
  %968 = vmatprep.subr.mxu0 %v32
  %969 = vmatpush1.msra.mxu0 %v31
  %970 = vmatprep.subr.mxu0 %v34
  %971 = vmatpush1.msra.mxu0 %v33
  %972 = vmatprep.subr.mxu0 %v36
  %973 = vmatpush1.msra.mxu0 %v35
  %974 = vmatprep.subr.mxu0 %v38
  %975 = vmatpush1.msra.mxu0 %v37
  %976 = vmatprep.subr.mxu0 %v40
  %977 = vmatpush1.msra.mxu0 %v39
  %978 = vmatprep.subr.mxu0 %v42
  %979 = vmatpush1.msra.mxu0 %v41
  %980 = vmatprep.subr.mxu0 %v44
  %981 = vmatpush1.msra.mxu0 %v43
  %982 = vmatprep.subr.mxu0 %v46
  %983 = vmatpush1.msra.mxu0 %v45
  %984 = vmatprep.subr.mxu0 %v48
  %985 = vmatpush1.msra.mxu0 %v47
  %986 = vmatprep.subr.mxu0 0.0
  %987 = vmatpush1.msra.mxu0 0.0
  %988 = vmatprep.subr.mxu0 0.0
  %989 = vmatpush1.msra.mxu0 0.0
  %990 = vmatprep.subr.mxu0 0.0
  %991 = vmatpush1.msra.mxu0 0.0
  %992 = vmatprep.subr.mxu0 0.0
  %993 = vmatpush1.msra.mxu0 0.0
  %994 = vmatprep.subr.mxu0 0.0
  %995 = vmatpush1.msra.mxu0 0.0
  %996 = vmatprep.subr.mxu0 0.0
  %997 = vmatpush1.msra.mxu0 0.0
  %998 = vmatprep.subr.mxu0 0.0
  %999 = vmatpush1.msra.mxu0 0.0
  %1000 = vmatprep.subr.mxu0 0.0
  %1001 = vmatpush1.msra.mxu0 0.0
  %1002 = vmatprep.subr.mxu0 0.0
  %1003 = vmatpush1.msra.mxu0 0.0
  %1004 = vmatprep.subr.mxu0 0.0
  %1005 = vmatpush1.msra.mxu0 0.0
  %1006 = vmatprep.subr.mxu0 0.0
  %1007 = vmatpush1.msra.mxu0 0.0
  %1008 = vmatprep.subr.mxu0 0.0
  %1009 = vmatpush1.msra.mxu0 0.0
  %1010 = vmatprep.subr.mxu0 0.0
  %1011 = vmatpush1.msra.mxu0 0.0
  %1012 = vmatprep.subr.mxu0 0.0
  %1013 = vmatpush1.msra.mxu0 0.0
  %1014 = vmatprep.subr.mxu0 0.0
  %1015 = vmatpush1.msra.mxu0 0.0
  %1016 = vmatprep.subr.mxu0 0.0
  %1017 = vmatpush1.msra.mxu0 0.0
  %1018 = vmatprep.mubr.f32.mxu0 0.0
  %1019 = vmatmul.mubr.f32.gmra.mrb[0].mxu0 %v875
  %v1020 = vpop.f32.mrb[0].mxu0
  %v1021 = vadd.f32 %v952, %v1020
  %v1022 = vpop.f32.mrb[0].mxu0
  %v1023 = vadd.f32 %v953, %v1022
  %1024 = vdwg.mxu0
  %v1025 = vtanh.pop %v1021
  %v1026 = vtanh.pop %v1023
  %v1027 = vmul.f32 %v875, %v76
  %v1028 = vmul.f32 %v1025, %v78
  %v1029 = vadd.f32 %v1027, %v1028
  %v1030 = vmul.f32 %v1026, %v80
  %v1031 = vadd.f32 %v1029, %v1030
  %v1032 = vmax.f32 %v1031, %v68
  %v1033 = vmin.f32 %v1032, %v70
  %1034 = vmatprep.subr.mxu0 0.0
  %1035 = vmatpush1.msra.mxu0 %v49
  %1036 = vmatprep.subr.mxu0 0.0
  %1037 = vmatpush1.msra.mxu0 %v50
  %1038 = vmatprep.subr.mxu0 0.0
  %1039 = vmatpush1.msra.mxu0 %v51
  %1040 = vmatprep.subr.mxu0 0.0
  %1041 = vmatpush1.msra.mxu0 %v52
  %1042 = vmatprep.subr.mxu0 0.0
  %1043 = vmatpush1.msra.mxu0 %v53
  %1044 = vmatprep.subr.mxu0 0.0
  %1045 = vmatpush1.msra.mxu0 %v54
  %1046 = vmatprep.subr.mxu0 0.0
  %1047 = vmatpush1.msra.mxu0 %v55
  %1048 = vmatprep.subr.mxu0 0.0
  %1049 = vmatpush1.msra.mxu0 %v56
  %1050 = vmatprep.subr.mxu0 0.0
  %1051 = vmatpush1.msra.mxu0 %v57
  %1052 = vmatprep.subr.mxu0 0.0
  %1053 = vmatpush1.msra.mxu0 %v58
  %1054 = vmatprep.subr.mxu0 0.0
  %1055 = vmatpush1.msra.mxu0 %v59
  %1056 = vmatprep.subr.mxu0 0.0
  %1057 = vmatpush1.msra.mxu0 %v60
  %1058 = vmatprep.subr.mxu0 0.0
  %1059 = vmatpush1.msra.mxu0 %v61
  %1060 = vmatprep.subr.mxu0 0.0
  %1061 = vmatpush1.msra.mxu0 %v62
  %1062 = vmatprep.subr.mxu0 0.0
  %1063 = vmatpush1.msra.mxu0 %v63
  %1064 = vmatprep.subr.mxu0 0.0
  %1065 = vmatpush1.msra.mxu0 %v64
  %1066 = vmatprep.subr.mxu0 0.0
  %1067 = vmatpush1.msra.mxu0 0.0
  %1068 = vmatprep.subr.mxu0 0.0
  %1069 = vmatpush1.msra.mxu0 0.0
  %1070 = vmatprep.subr.mxu0 0.0
  %1071 = vmatpush1.msra.mxu0 0.0
  %1072 = vmatprep.subr.mxu0 0.0
  %1073 = vmatpush1.msra.mxu0 0.0
  %1074 = vmatprep.subr.mxu0 0.0
  %1075 = vmatpush1.msra.mxu0 0.0
  %1076 = vmatprep.subr.mxu0 0.0
  %1077 = vmatpush1.msra.mxu0 0.0
  %1078 = vmatprep.subr.mxu0 0.0
  %1079 = vmatpush1.msra.mxu0 0.0
  %1080 = vmatprep.subr.mxu0 0.0
  %1081 = vmatpush1.msra.mxu0 0.0
  %1082 = vmatprep.subr.mxu0 0.0
  %1083 = vmatpush1.msra.mxu0 0.0
  %1084 = vmatprep.subr.mxu0 0.0
  %1085 = vmatpush1.msra.mxu0 0.0
  %1086 = vmatprep.subr.mxu0 0.0
  %1087 = vmatpush1.msra.mxu0 0.0
  %1088 = vmatprep.subr.mxu0 0.0
  %1089 = vmatpush1.msra.mxu0 0.0
  %1090 = vmatprep.subr.mxu0 0.0
  %1091 = vmatpush1.msra.mxu0 0.0
  %1092 = vmatprep.subr.mxu0 0.0
  %1093 = vmatpush1.msra.mxu0 0.0
  %1094 = vmatprep.subr.mxu0 0.0
  %1095 = vmatpush1.msra.mxu0 0.0
  %1096 = vmatprep.subr.mxu0 0.0
  %1097 = vmatpush1.msra.mxu0 0.0
  %1098 = vmatprep.mubr.f32.mxu0 0.0
  %1099 = vmatmul.mubr.f32.gmra.mrb[0].mxu0 %v1031
  %v1100 = vpop.f32.mrb[0].mxu0
  %v1101 = vadd.f32 %v66, %v1100
  %v1102 = vpop.f32.mrb[0].mxu0
  %1103 = vdwg.mxu0
  %v1104 = vmax.f32 %v1101, %v72
  %v1105 = vmin.f32 %v1104, %v74
  %v1106 = vadd.f32 %v1033, %v1105
  %s1107 = scalar_lea.vmem %s4, 48
  %1108 = vst [vmem:[%s1107] sm:$0xff] %v1106
  %s1109 = scalar_lea.vmem %s0, 96
  %v1110 = vld [vmem:[%s1109] sm:$0xff]
  %v1111 = vld [vmem:[%s1109 + $0x8] sm:$0xff]
  %1112 = vmatprep.subr.mxu0 %v18
  %1113 = vmatpush1.msra.mxu0 %v17
  %1114 = vmatprep.subr.mxu0 %v20
  %1115 = vmatpush1.msra.mxu0 %v19
  %1116 = vmatprep.subr.mxu0 %v22
  %1117 = vmatpush1.msra.mxu0 %v21
  %1118 = vmatprep.subr.mxu0 %v24
  %1119 = vmatpush1.msra.mxu0 %v23
  %1120 = vmatprep.subr.mxu0 %v26
  %1121 = vmatpush1.msra.mxu0 %v25
  %1122 = vmatprep.subr.mxu0 %v28
  %1123 = vmatpush1.msra.mxu0 %v27
  %1124 = vmatprep.subr.mxu0 %v30
  %1125 = vmatpush1.msra.mxu0 %v29
  %1126 = vmatprep.subr.mxu0 %v32
  %1127 = vmatpush1.msra.mxu0 %v31
  %1128 = vmatprep.subr.mxu0 %v34
  %1129 = vmatpush1.msra.mxu0 %v33
  %1130 = vmatprep.subr.mxu0 %v36
  %1131 = vmatpush1.msra.mxu0 %v35
  %1132 = vmatprep.subr.mxu0 %v38
  %1133 = vmatpush1.msra.mxu0 %v37
  %1134 = vmatprep.subr.mxu0 %v40
  %1135 = vmatpush1.msra.mxu0 %v39
  %1136 = vmatprep.subr.mxu0 %v42
  %1137 = vmatpush1.msra.mxu0 %v41
  %1138 = vmatprep.subr.mxu0 %v44
  %1139 = vmatpush1.msra.mxu0 %v43
  %1140 = vmatprep.subr.mxu0 %v46
  %1141 = vmatpush1.msra.mxu0 %v45
  %1142 = vmatprep.subr.mxu0 %v48
  %1143 = vmatpush1.msra.mxu0 %v47
  %1144 = vmatprep.subr.mxu0 0.0
  %1145 = vmatpush1.msra.mxu0 0.0
  %1146 = vmatprep.subr.mxu0 0.0
  %1147 = vmatpush1.msra.mxu0 0.0
  %1148 = vmatprep.subr.mxu0 0.0
  %1149 = vmatpush1.msra.mxu0 0.0
  %1150 = vmatprep.subr.mxu0 0.0
  %1151 = vmatpush1.msra.mxu0 0.0
  %1152 = vmatprep.subr.mxu0 0.0
  %1153 = vmatpush1.msra.mxu0 0.0
  %1154 = vmatprep.subr.mxu0 0.0
  %1155 = vmatpush1.msra.mxu0 0.0
  %1156 = vmatprep.subr.mxu0 0.0
  %1157 = vmatpush1.msra.mxu0 0.0
  %1158 = vmatprep.subr.mxu0 0.0
  %1159 = vmatpush1.msra.mxu0 0.0
  %1160 = vmatprep.subr.mxu0 0.0
  %1161 = vmatpush1.msra.mxu0 0.0
  %1162 = vmatprep.subr.mxu0 0.0
  %1163 = vmatpush1.msra.mxu0 0.0
  %1164 = vmatprep.subr.mxu0 0.0
  %1165 = vmatpush1.msra.mxu0 0.0
  %1166 = vmatprep.subr.mxu0 0.0
  %1167 = vmatpush1.msra.mxu0 0.0
  %1168 = vmatprep.subr.mxu0 0.0
  %1169 = vmatpush1.msra.mxu0 0.0
  %1170 = vmatprep.subr.mxu0 0.0
  %1171 = vmatpush1.msra.mxu0 0.0
  %1172 = vmatprep.subr.mxu0 0.0
  %1173 = vmatpush1.msra.mxu0 0.0
  %1174 = vmatprep.subr.mxu0 0.0
  %1175 = vmatpush1.msra.mxu0 0.0
  %1176 = vmatprep.mubr.f32.mxu0 0.0
  %1177 = vmatmul.mubr.f32.gmra.mrb[0].mxu0 %v1033
  %v1178 = vpop.f32.mrb[0].mxu0
  %v1179 = vadd.f32 %v1110, %v1178
  %v1180 = vpop.f32.mrb[0].mxu0
  %v1181 = vadd.f32 %v1111, %v1180
  %1182 = vdwg.mxu0
  %v1183 = vtanh.pop %v1179
  %v1184 = vtanh.pop %v1181
  %v1185 = vmul.f32 %v1033, %v76
  %v1186 = vmul.f32 %v1183, %v78
  %v1187 = vadd.f32 %v1185, %v1186
  %v1188 = vmul.f32 %v1184, %v80
  %v1189 = vadd.f32 %v1187, %v1188
  %v1190 = vmax.f32 %v1189, %v68
  %v1191 = vmin.f32 %v1190, %v70
  %1192 = vmatprep.subr.mxu0 0.0
  %1193 = vmatpush1.msra.mxu0 %v49
  %1194 = vmatprep.subr.mxu0 0.0
  %1195 = vmatpush1.msra.mxu0 %v50
  %1196 = vmatprep.subr.mxu0 0.0
  %1197 = vmatpush1.msra.mxu0 %v51
  %1198 = vmatprep.subr.mxu0 0.0
  %1199 = vmatpush1.msra.mxu0 %v52
  %1200 = vmatprep.subr.mxu0 0.0
  %1201 = vmatpush1.msra.mxu0 %v53
  %1202 = vmatprep.subr.mxu0 0.0
  %1203 = vmatpush1.msra.mxu0 %v54
  %1204 = vmatprep.subr.mxu0 0.0
  %1205 = vmatpush1.msra.mxu0 %v55
  %1206 = vmatprep.subr.mxu0 0.0
  %1207 = vmatpush1.msra.mxu0 %v56
  %1208 = vmatprep.subr.mxu0 0.0
  %1209 = vmatpush1.msra.mxu0 %v57
  %1210 = vmatprep.subr.mxu0 0.0
  %1211 = vmatpush1.msra.mxu0 %v58
  %1212 = vmatprep.subr.mxu0 0.0
  %1213 = vmatpush1.msra.mxu0 %v59
  %1214 = vmatprep.subr.mxu0 0.0
  %1215 = vmatpush1.msra.mxu0 %v60
  %1216 = vmatprep.subr.mxu0 0.0
  %1217 = vmatpush1.msra.mxu0 %v61
  %1218 = vmatprep.subr.mxu0 0.0
  %1219 = vmatpush1.msra.mxu0 %v62
  %1220 = vmatprep.subr.mxu0 0.0
  %1221 = vmatpush1.msra.mxu0 %v63
  %1222 = vmatprep.subr.mxu0 0.0
  %1223 = vmatpush1.msra.mxu0 %v64
  %1224 = vmatprep.subr.mxu0 0.0
  %1225 = vmatpush1.msra.mxu0 0.0
  %1226 = vmatprep.subr.mxu0 0.0
  %1227 = vmatpush1.msra.mxu0 0.0
  %1228 = vmatprep.subr.mxu0 0.0
  %1229 = vmatpush1.msra.mxu0 0.0
  %1230 = vmatprep.subr.mxu0 0.0
  %1231 = vmatpush1.msra.mxu0 0.0
  %1232 = vmatprep.subr.mxu0 0.0
  %1233 = vmatpush1.msra.mxu0 0.0
  %1234 = vmatprep.subr.mxu0 0.0
  %1235 = vmatpush1.msra.mxu0 0.0
  %1236 = vmatprep.subr.mxu0 0.0
  %1237 = vmatpush1.msra.mxu0 0.0
  %1238 = vmatprep.subr.mxu0 0.0
  %1239 = vmatpush1.msra.mxu0 0.0
  %1240 = vmatprep.subr.mxu0 0.0
  %1241 = vmatpush1.msra.mxu0 0.0
  %1242 = vmatprep.subr.mxu0 0.0
  %1243 = vmatpush1.msra.mxu0 0.0
  %1244 = vmatprep.subr.mxu0 0.0
  %1245 = vmatpush1.msra.mxu0 0.0
  %1246 = vmatprep.subr.mxu0 0.0
  %1247 = vmatpush1.msra.mxu0 0.0
  %1248 = vmatprep.subr.mxu0 0.0
  %1249 = vmatpush1.msra.mxu0 0.0
  %1250 = vmatprep.subr.mxu0 0.0
  %1251 = vmatpush1.msra.mxu0 0.0
  %1252 = vmatprep.subr.mxu0 0.0
  %1253 = vmatpush1.msra.mxu0 0.0
  %1254 = vmatprep.subr.mxu0 0.0
  %1255 = vmatpush1.msra.mxu0 0.0
  %1256 = vmatprep.mubr.f32.mxu0 0.0
  %1257 = vmatmul.mubr.f32.gmra.mrb[0].mxu0 %v1189
  %v1258 = vpop.f32.mrb[0].mxu0
  %v1259 = vadd.f32 %v66, %v1258
  %v1260 = vpop.f32.mrb[0].mxu0
  %1261 = vdwg.mxu0
  %v1262 = vmax.f32 %v1259, %v72
  %v1263 = vmin.f32 %v1262, %v74
  %v1264 = vadd.f32 %v1191, %v1263
  %s1265 = scalar_lea.vmem %s4, 56
  %1266 = vst [vmem:[%s1265] sm:$0xff] %v1264
  %s1267 = scalar_lea.vmem %s0, 112
  %v1268 = vld [vmem:[%s1267] sm:$0xff]
  %v1269 = vld [vmem:[%s1267 + $0x8] sm:$0xff]
  %1270 = vmatprep.subr.mxu0 %v18
  %1271 = vmatpush1.msra.mxu0 %v17
  %1272 = vmatprep.subr.mxu0 %v20
  %1273 = vmatpush1.msra.mxu0 %v19
  %1274 = vmatprep.subr.mxu0 %v22
  %1275 = vmatpush1.msra.mxu0 %v21
  %1276 = vmatprep.subr.mxu0 %v24
  %1277 = vmatpush1.msra.mxu0 %v23
  %1278 = vmatprep.subr.mxu0 %v26
  %1279 = vmatpush1.msra.mxu0 %v25
  %1280 = vmatprep.subr.mxu0 %v28
  %1281 = vmatpush1.msra.mxu0 %v27
  %1282 = vmatprep.subr.mxu0 %v30
  %1283 = vmatpush1.msra.mxu0 %v29
  %1284 = vmatprep.subr.mxu0 %v32
  %1285 = vmatpush1.msra.mxu0 %v31
  %1286 = vmatprep.subr.mxu0 %v34
  %1287 = vmatpush1.msra.mxu0 %v33
  %1288 = vmatprep.subr.mxu0 %v36
  %1289 = vmatpush1.msra.mxu0 %v35
  %1290 = vmatprep.subr.mxu0 %v38
  %1291 = vmatpush1.msra.mxu0 %v37
  %1292 = vmatprep.subr.mxu0 %v40
  %1293 = vmatpush1.msra.mxu0 %v39
  %1294 = vmatprep.subr.mxu0 %v42
  %1295 = vmatpush1.msra.mxu0 %v41
  %1296 = vmatprep.subr.mxu0 %v44
  %1297 = vmatpush1.msra.mxu0 %v43
  %1298 = vmatprep.subr.mxu0 %v46
  %1299 = vmatpush1.msra.mxu0 %v45
  %1300 = vmatprep.subr.mxu0 %v48
  %1301 = vmatpush1.msra.mxu0 %v47
  %1302 = vmatprep.subr.mxu0 0.0
  %1303 = vmatpush1.msra.mxu0 0.0
  %1304 = vmatprep.subr.mxu0 0.0
  %1305 = vmatpush1.msra.mxu0 0.0
  %1306 = vmatprep.subr.mxu0 0.0
  %1307 = vmatpush1.msra.mxu0 0.0
  %1308 = vmatprep.subr.mxu0 0.0
  %1309 = vmatpush1.msra.mxu0 0.0
  %1310 = vmatprep.subr.mxu0 0.0
  %1311 = vmatpush1.msra.mxu0 0.0
  %1312 = vmatprep.subr.mxu0 0.0
  %1313 = vmatpush1.msra.mxu0 0.0
  %1314 = vmatprep.subr.mxu0 0.0
  %1315 = vmatpush1.msra.mxu0 0.0
  %1316 = vmatprep.subr.mxu0 0.0
  %1317 = vmatpush1.msra.mxu0 0.0
  %1318 = vmatprep.subr.mxu0 0.0
  %1319 = vmatpush1.msra.mxu0 0.0
  %1320 = vmatprep.subr.mxu0 0.0
  %1321 = vmatpush1.msra.mxu0 0.0
  %1322 = vmatprep.subr.mxu0 0.0
  %1323 = vmatpush1.msra.mxu0 0.0
  %1324 = vmatprep.subr.mxu0 0.0
  %1325 = vmatpush1.msra.mxu0 0.0
  %1326 = vmatprep.subr.mxu0 0.0
  %1327 = vmatpush1.msra.mxu0 0.0
  %1328 = vmatprep.subr.mxu0 0.0
  %1329 = vmatpush1.msra.mxu0 0.0
  %1330 = vmatprep.subr.mxu0 0.0
  %1331 = vmatpush1.msra.mxu0 0.0
  %1332 = vmatprep.subr.mxu0 0.0
  %1333 = vmatpush1.msra.mxu0 0.0
  %1334 = vmatprep.mubr.f32.mxu0 0.0
  %1335 = vmatmul.mubr.f32.gmra.mrb[0].mxu0 %v1191
  %v1336 = vpop.f32.mrb[0].mxu0
  %v1337 = vadd.f32 %v1268, %v1336
  %v1338 = vpop.f32.mrb[0].mxu0
  %v1339 = vadd.f32 %v1269, %v1338
  %1340 = vdwg.mxu0
  %v1341 = vtanh.pop %v1337
  %v1342 = vtanh.pop %v1339
  %v1343 = vmul.f32 %v1191, %v76
  %v1344 = vmul.f32 %v1341, %v78
  %v1345 = vadd.f32 %v1343, %v1344
  %v1346 = vmul.f32 %v1342, %v80
  %v1347 = vadd.f32 %v1345, %v1346
  %v1348 = vmax.f32 %v1347, %v68
  %v1349 = vmin.f32 %v1348, %v70
  %1350 = vmatprep.subr.mxu0 0.0
  %1351 = vmatpush1.msra.mxu0 %v49
  %1352 = vmatprep.subr.mxu0 0.0
  %1353 = vmatpush1.msra.mxu0 %v50
  %1354 = vmatprep.subr.mxu0 0.0
  %1355 = vmatpush1.msra.mxu0 %v51
  %1356 = vmatprep.subr.mxu0 0.0
  %1357 = vmatpush1.msra.mxu0 %v52
  %1358 = vmatprep.subr.mxu0 0.0
  %1359 = vmatpush1.msra.mxu0 %v53
  %1360 = vmatprep.subr.mxu0 0.0
  %1361 = vmatpush1.msra.mxu0 %v54
  %1362 = vmatprep.subr.mxu0 0.0
  %1363 = vmatpush1.msra.mxu0 %v55
  %1364 = vmatprep.subr.mxu0 0.0
  %1365 = vmatpush1.msra.mxu0 %v56
  %1366 = vmatprep.subr.mxu0 0.0
  %1367 = vmatpush1.msra.mxu0 %v57
  %1368 = vmatprep.subr.mxu0 0.0
  %1369 = vmatpush1.msra.mxu0 %v58
  %1370 = vmatprep.subr.mxu0 0.0
  %1371 = vmatpush1.msra.mxu0 %v59
  %1372 = vmatprep.subr.mxu0 0.0
  %1373 = vmatpush1.msra.mxu0 %v60
  %1374 = vmatprep.subr.mxu0 0.0
  %1375 = vmatpush1.msra.mxu0 %v61
  %1376 = vmatprep.subr.mxu0 0.0
  %1377 = vmatpush1.msra.mxu0 %v62
  %1378 = vmatprep.subr.mxu0 0.0
  %1379 = vmatpush1.msra.mxu0 %v63
  %1380 = vmatprep.subr.mxu0 0.0
  %1381 = vmatpush1.msra.mxu0 %v64
  %1382 = vmatprep.subr.mxu0 0.0
  %1383 = vmatpush1.msra.mxu0 0.0
  %1384 = vmatprep.subr.mxu0 0.0
  %1385 = vmatpush1.msra.mxu0 0.0
  %1386 = vmatprep.subr.mxu0 0.0
  %1387 = vmatpush1.msra.mxu0 0.0
  %1388 = vmatprep.subr.mxu0 0.0
  %1389 = vmatpush1.msra.mxu0 0.0
  %1390 = vmatprep.subr.mxu0 0.0
  %1391 = vmatpush1.msra.mxu0 0.0
  %1392 = vmatprep.subr.mxu0 0.0
  %1393 = vmatpush1.msra.mxu0 0.0
  %1394 = vmatprep.subr.mxu0 0.0
  %1395 = vmatpush1.msra.mxu0 0.0
  %1396 = vmatprep.subr.mxu0 0.0
  %1397 = vmatpush1.msra.mxu0 0.0
  %1398 = vmatprep.subr.mxu0 0.0
  %1399 = vmatpush1.msra.mxu0 0.0
  %1400 = vmatprep.subr.mxu0 0.0
  %1401 = vmatpush1.msra.mxu0 0.0
  %1402 = vmatprep.subr.mxu0 0.0
  %1403 = vmatpush1.msra.mxu0 0.0
  %1404 = vmatprep.subr.mxu0 0.0
  %1405 = vmatpush1.msra.mxu0 0.0
  %1406 = vmatprep.subr.mxu0 0.0
  %1407 = vmatpush1.msra.mxu0 0.0
  %1408 = vmatprep.subr.mxu0 0.0
  %1409 = vmatpush1.msra.mxu0 0.0
  %1410 = vmatprep.subr.mxu0 0.0
  %1411 = vmatpush1.msra.mxu0 0.0
  %1412 = vmatprep.subr.mxu0 0.0
  %1413 = vmatpush1.msra.mxu0 0.0
  %1414 = vmatprep.mubr.f32.mxu0 0.0
  %1415 = vmatmul.mubr.f32.gmra.mrb[0].mxu0 %v1347
  %v1416 = vpop.f32.mrb[0].mxu0
  %v1417 = vadd.f32 %v66, %v1416
  %v1418 = vpop.f32.mrb[0].mxu0
  %1419 = vdwg.mxu0
  %v1420 = vmax.f32 %v1417, %v72
  %v1421 = vmin.f32 %v1420, %v74
  %1422 = vst [vmem:[#allocation2] sm:$0xff] %v1349
  %1423 = vst [vmem:[#allocation3] sm:$0xff] %v1421
  // Predicated region
  $region22: #{run_simulator.1} parent=0 // pred_check
    _
  $region23: #{run_simulator.1} parent=0 // pred_check_branch
    %1425 = sbr.rel (0) target = $region25
  $region24: #{run_simulator.1} parent=0 // pred_region
    _
  $region25: #{run_simulator.1} parent=0 // pred_fallthru
    _
  // Predicated region
  $region26: #{run_simulator.1} parent=0 // pred_check
    _
  $region27: #{run_simulator.1} parent=0 // pred_check_branch
    %1427 = sbr.rel (0) target = $region29
  $region28: #{run_simulator.1} parent=0 // pred_region
    _
  $region29: #{run_simulator.1} parent=0 // pred_fallthru
    _

</llo_original>
